<compile_context>
chip_gen: v7x
topology: tpu7x:2x2x1
jax: 0.10.0
libtpu: 0.0.40
codegen_flags: <defaults>
</compile_context>

<pallas_src>
import functools
import math

import jax
import jax.numpy as jnp
from jax.experimental import pallas as pl
from jax.experimental.pallas import tpu as pltpu

# ---------------- small synthetic config ----------------
CFG = dict(
    vocab_size=64,
    dim=32,
    n_layer=2,
    n_head=4,
    n_local_heads=2,     # GQA: 2 kv heads shared by 4 query heads
    head_dim=8,          # dim // n_head
    intermediate_size=64,
    block_size=16,
    rope_base=10000.0,
    norm_eps=1e-5,
)

VMEM_LIMIT_BYTES = 32 * 1024 * 1024   # explicit scoped-VMEM budget (safe on v5e/v6e/v7x)


def find_multiple(n: int, k: int) -> int:
    return n if n % k == 0 else n + k - (n % k)


# ---------------- tiling helpers ----------------
def _tile_rows(m: int, pref: int = 256) -> int:
    """Sublane-dim tile: multiple of 8 (or the full dim)."""
    if m <= pref:
        return m
    t = pref - (pref % 8)
    while t >= 8:
        if m % t == 0:
            return t
        t -= 8
    return m


def _tile_lanes(n: int, pref: int = 512) -> int:
    """Lane-dim tile: prefer 256-multiples (v6e MXU width), else 128, else full dim."""
    if n <= pref:
        return n
    for t in (pref, 256, 128):
        if n % t == 0:
            return t
    return n


# ---------------- Pallas kernels ----------------
def _norm_matmul_kernel(x_ref, nw_ref, w_ref, o_ref, *, eps):
    """out = rmsnorm(x) @ W   (norm in f32, matmul bf16 x bf16 -> f32 accum)."""
    x = x_ref[...].astype(jnp.float32)
    ms = jnp.mean(x * x, axis=-1, keepdims=True)
    xn = (x * jax.lax.rsqrt(ms + eps)) * nw_ref[...]
    o_ref[...] = jnp.dot(xn.astype(jnp.bfloat16), w_ref[...],
                         preferred_element_type=jnp.float32)


def pallas_norm_matmul(x2d, norm_w, w_t, eps):
    """x2d: (M, K) f32, norm_w: (K,) f32, w_t: (K, N) bf16 -> (M, N) f32."""
    M, K = x2d.shape
    N = w_t.shape[1]
    tm, tn = _tile_rows(M), _tile_lanes(N)
    return pl.pallas_call(
        functools.partial(_norm_matmul_kernel, eps=eps),
        grid=(M // tm, N // tn),
        in_specs=[
            pl.BlockSpec((tm, K), lambda i, j: (i, 0)),
            pl.BlockSpec((1, K), lambda i, j: (0, 0)),
            pl.BlockSpec((K, tn), lambda i, j: (0, j)),
        ],
        out_specs=pl.BlockSpec((tm, tn), lambda i, j: (i, j)),
        out_shape=jax.ShapeDtypeStruct((M, N), jnp.float32),
        compiler_params=pltpu.CompilerParams(
            dimension_semantics=("parallel", "parallel"),
            vmem_limit_bytes=VMEM_LIMIT_BYTES),
    )(x2d, norm_w.reshape(1, K), w_t)


def _matmul_residual_kernel(y_ref, w_ref, r_ref, o_ref):
    """out = resid + y @ W."""
    y = y_ref[...].astype(jnp.bfloat16)
    o_ref[...] = r_ref[...] + jnp.dot(y, w_ref[...],
                                      preferred_element_type=jnp.float32)


def pallas_matmul_residual(y2d, w_t, resid2d):
    """y2d: (M, K) f32, w_t: (K, N) bf16, resid2d: (M, N) f32 -> (M, N) f32."""
    M, K = y2d.shape
    N = w_t.shape[1]
    tm, tn = _tile_rows(M), _tile_lanes(N)
    return pl.pallas_call(
        _matmul_residual_kernel,
        grid=(M // tm, N // tn),
        in_specs=[
            pl.BlockSpec((tm, K), lambda i, j: (i, 0)),
            pl.BlockSpec((K, tn), lambda i, j: (0, j)),
            pl.BlockSpec((tm, tn), lambda i, j: (i, j)),
        ],
        out_specs=pl.BlockSpec((tm, tn), lambda i, j: (i, j)),
        out_shape=jax.ShapeDtypeStruct((M, N), jnp.float32),
        compiler_params=pltpu.CompilerParams(
            dimension_semantics=("parallel", "parallel"),
            vmem_limit_bytes=VMEM_LIMIT_BYTES),
    )(y2d, w_t, resid2d)


def _ffn_kernel(h_ref, nw_ref, w1_ref, w3_ref, w2_ref, o_ref, hn_ref, *, eps):
    """out = h + W2( SiLU(hn @ W1) * (hn @ W3) ), hn = rmsnorm(h).

    Grid axis 1 reduces over tiles of the intermediate dim; the output block is
    resident across it and acts as the accumulator (init via pl.when(k == 0)).
    """
    k_idx = pl.program_id(1)

    @pl.when(k_idx == 0)
    def _():
        h = h_ref[...].astype(jnp.float32)
        ms = jnp.mean(h * h, axis=-1, keepdims=True)
        hn = (h * jax.lax.rsqrt(ms + eps)) * nw_ref[...]
        hn_ref[...] = hn.astype(jnp.bfloat16)
        o_ref[...] = h                      # residual init

    hn = hn_ref[...]
    h1 = jnp.dot(hn, w1_ref[...], preferred_element_type=jnp.float32)
    h3 = jnp.dot(hn, w3_ref[...], preferred_element_type=jnp.float32)
    g = (h1 * jax.nn.sigmoid(h1)) * h3      # SiLU gate in f32 (v5e has no bf16 VPU/EUP)
    o_ref[...] += jnp.dot(g.astype(jnp.bfloat16), w2_ref[...],
                          preferred_element_type=jnp.float32)


def pallas_ffn(h2d, norm_w, w1_t, w3_t, w2_t, eps):
    """h2d: (M, D) f32; w1_t/w3_t: (D, I) bf16; w2_t: (I, D) bf16 -> (M, D) f32."""
    M, D = h2d.shape
    I = w1_t.shape[1]
    tm, tk = _tile_rows(M), _tile_lanes(I)
    return pl.pallas_call(
        functools.partial(_ffn_kernel, eps=eps),
        grid=(M // tm, I // tk),
        in_specs=[
            pl.BlockSpec((tm, D), lambda i, k: (i, 0)),
            pl.BlockSpec((1, D), lambda i, k: (0, 0)),
            pl.BlockSpec((D, tk), lambda i, k: (0, k)),
            pl.BlockSpec((D, tk), lambda i, k: (0, k)),
            pl.BlockSpec((tk, D), lambda i, k: (k, 0)),
        ],
        out_specs=pl.BlockSpec((tm, D), lambda i, k: (i, 0)),
        out_shape=jax.ShapeDtypeStruct((M, D), jnp.float32),
        scratch_shapes=[pltpu.VMEM((tm, D), jnp.bfloat16)],
        compiler_params=pltpu.CompilerParams(
            dimension_semantics=("parallel", "arbitrary"),
            vmem_limit_bytes=VMEM_LIMIT_BYTES),
    )(h2d, norm_w.reshape(1, D), w1_t, w3_t, w2_t)


def _attention_kernel(q_ref, k_ref, v_ref, cos_ref, sin_ref, bias_ref, o_ref,
                      *, n_head, n_kv, head_dim, scale):
    """Per-batch attention over all heads, with RoPE fused in.

    q: (S, H*hd), k/v: (S, Hkv*hd), cos/sin: (S, hd) interleave-expanded,
    bias: (S, S) additive mask.  Output: lane-dense (S, H*hd) = (S, dim).
    """
    q = q_ref[0].astype(jnp.float32)
    k = k_ref[0].astype(jnp.float32)
    v = v_ref[0].astype(jnp.float32)
    cos = cos_ref[0]
    sin = sin_ref[0]
    bias = bias_ref[0]
    hd = head_dim

    def rope(x):
        # Interleaved-pair rotation:
        #   out[:, 2i]   = x[:, 2i] * cos_i - x[:, 2i+1] * sin_i
        #   out[:, 2i+1] = x[:, 2i+1] * cos_i + x[:, 2i] * sin_i
        # The pair swap (x0, x1) -> (-x1, x0) is done with a tiny +-1 permutation
        # matmul (sign-unambiguous, MXU-friendly).
        n = x.shape[-1]
        r = jax.lax.broadcasted_iota(jnp.int32, (n, n), 0)
        c = jax.lax.broadcasted_iota(jnp.int32, (n, n), 1)
        swap = (jnp.where((c % 2 == 0) & (r == c + 1), -1.0, 0.0)
                + jnp.where((c % 2 == 1) & (r == c - 1), 1.0, 0.0)).astype(jnp.float32)
        nrep = n // hd
        cfull = jnp.concatenate([cos] * nrep, axis=-1)
        sfull = jnp.concatenate([sin] * nrep, axis=-1)
        xs = jax.lax.dot_general(x, swap, (((1,), (0,)), ((), ())),
                                 preferred_element_type=jnp.float32)
        return x * cfull + xs * sfull

    q = rope(q) * scale          # fold the softmax scale into q
    k = rope(k)

    group = n_head // n_kv
    qh = jnp.stack([q[:, h * hd:(h + 1) * hd] for h in range(n_head)], axis=0)
    kh = jnp.stack([k[:, (h // group) * hd:((h // group) + 1) * hd]
                    for h in range(n_head)], axis=0)
    vh = jnp.stack([v[:, (h // group) * hd:((h // group) + 1) * hd]
                    for h in range(n_head)], axis=0)

    s = jnp.einsum('hqd,hkd->hqk', qh.astype(jnp.bfloat16), kh.astype(jnp.bfloat16),
                   preferred_element_type=jnp.float32)
    s = s + bias[None, :, :]
    m = jnp.max(s, axis=-1, keepdims=True)
    p = jnp.exp(s - m)                                   # f32 softmax (EUP)
    l = jnp.sum(p, axis=-1, keepdims=True)
    o = jnp.einsum('hqk,hkd->hqd', p.astype(jnp.bfloat16), vh.astype(jnp.bfloat16),
                   preferred_element_type=jnp.float32)
    o = o * pl.reciprocal(l, approx=True)
    o_ref[0] = jnp.concatenate([o[h] for h in range(n_head)],
                               axis=-1).astype(o_ref.dtype)


def pallas_attention(q, k, v, cos_e, sin_e, bias, n_head, n_kv, head_dim):
    """q: (B,S,H*hd), k/v: (B,S,Hkv*hd), cos/sin: (B,S,hd), bias: (B,S,S) -> (B,S,H*hd)."""
    B, S, Dq = q.shape
    Dkv = k.shape[2]
    scale = 1.0 / math.sqrt(head_dim)
    kern = functools.partial(_attention_kernel, n_head=n_head, n_kv=n_kv,
                             head_dim=head_dim, scale=scale)
    return pl.pallas_call(
        kern,
        grid=(B,),
        in_specs=[
            pl.BlockSpec((1, S, Dq), lambda b: (b, 0, 0)),
            pl.BlockSpec((1, S, Dkv), lambda b: (b, 0, 0)),
            pl.BlockSpec((1, S, Dkv), lambda b: (b, 0, 0)),
            pl.BlockSpec((1, S, head_dim), lambda b: (b, 0, 0)),
            pl.BlockSpec((1, S, head_dim), lambda b: (b, 0, 0)),
            pl.BlockSpec((1, S, S), lambda b: (b, 0, 0)),
        ],
        out_specs=pl.BlockSpec((1, S, Dq), lambda b: (b, 0, 0)),
        out_shape=jax.ShapeDtypeStruct((B, S, Dq), jnp.float32),
        compiler_params=pltpu.CompilerParams(
            dimension_semantics=("parallel",),
            vmem_limit_bytes=VMEM_LIMIT_BYTES),
    )(q, k, v, cos_e, sin_e, bias)


# ---------------- plain-JAX glue ----------------
def precompute_freqs_cis(seq_len, n_elem, base=10000.0):
    freqs = 1.0 / (base ** (jnp.arange(0, n_elem, 2)[: n_elem // 2].astype(jnp.float32) / n_elem))
    t = jnp.arange(seq_len, dtype=jnp.float32)
    freqs = jnp.outer(t, freqs)
    cache = jnp.stack([jnp.cos(freqs), jnp.sin(freqs)], axis=-1)
    return cache.astype(jnp.bfloat16)


def block_forward(x, p, cos_e, sin_e, bias, cfg):
    B, S, D = x.shape
    H, Hkv, hd = cfg["n_head"], cfg["n_local_heads"], cfg["head_dim"]
    kv_size = Hkv * hd
    eps = cfg["norm_eps"]
    x2 = x.reshape(B * S, D)

    # --- attention sub-block: fused norm+QKV, fused RoPE+attention, fused wo+residual ---
    qkv = pallas_norm_matmul(x2, p["attention_norm"], p["wqkv_t"], eps).reshape(B, S, -1)
    q, k, v = jnp.split(qkv, [D, D + kv_size], axis=-1)
    y = pallas_attention(q, k, v, cos_e, sin_e, bias, H, Hkv, hd)        # (B, S, D)
    h = pallas_matmul_residual(y.reshape(B * S, D), p["wo_t"], x2)       # x + wo(y)

    # --- feed-forward sub-block: fused norm + SwiGLU + residual ---
    out = pallas_ffn(h, p["ffn_norm"], p["w1_t"], p["w3_t"], p["w2_t"], eps)
    return out.reshape(B, S, D)


def transformer_forward(params, idx, input_pos, cfg):
    B, S = idx.shape
    D = cfg["dim"]

    # Causal mask restricted to the current (prefill) key positions: (B, S, S) bias.
    mask = params["causal_mask"][input_pos]                               # (B, S, max_seq)
    mask = jnp.take_along_axis(mask, input_pos[:, None, :], axis=2)       # (B, S, S)
    bias = jnp.where(mask, 0.0, -1e30).astype(jnp.float32)

    # RoPE tables, expanded to interleaved layout (cos_i duplicated over each pair).
    fc = params["freqs_cis"][input_pos].astype(jnp.float32)               # (B, S, hd//2, 2)
    cos_e = jnp.repeat(fc[..., 0], 2, axis=-1)                            # (B, S, hd)
    sin_e = jnp.repeat(fc[..., 1], 2, axis=-1)

    x = params["tok_embeddings"][idx]                                     # embedding gather (glue)
    for p in params["layers"]:
        x = block_forward(x, p, cos_e, sin_e, bias, cfg)

    logits = pallas_norm_matmul(x.reshape(B * S, D), params["norm"],
                                params["output_t"], cfg["norm_eps"])
    return logits.reshape(B, S, cfg["vocab_size"])


def init_params(key, cfg):
    D, V, I = cfg["dim"], cfg["vocab_size"], cfg["intermediate_size"]
    total_head_dim = (cfg["n_head"] + 2 * cfg["n_local_heads"]) * cfg["head_dim"]

    def lin_t(k, dout, din):
        # nn.Linear weight is (dout, din); store pre-transposed (din, dout) in bf16 so
        # no transpose / dtype conversion happens inside the jitted forward.
        w = 0.02 * jax.random.normal(k, (dout, din), dtype=jnp.float32)
        return w.T.astype(jnp.bfloat16)

    k_emb, k_out, *k_layers = jax.random.split(key, 2 + cfg["n_layer"])
    layers = []
    for kl in k_layers:
        k1, k2, k3, k4, k5 = jax.random.split(kl, 5)
        layers.append(dict(
            wqkv_t=lin_t(k1, total_head_dim, D),
            wo_t=lin_t(k2, D, D),
            w1_t=lin_t(k3, I, D),
            w3_t=lin_t(k4, I, D),
            w2_t=lin_t(k5, D, I),
            attention_norm=jnp.ones((D,), jnp.float32),
            ffn_norm=jnp.ones((D,), jnp.float32),
        ))
    return dict(
        tok_embeddings=(0.02 * jax.random.normal(k_emb, (V, D))).astype(jnp.float32),
        output_t=lin_t(k_out, V, D),
        norm=jnp.ones((D,), jnp.float32),
        layers=layers,
        freqs_cis=precompute_freqs_cis(cfg["block_size"], cfg["head_dim"], cfg["rope_base"]),
        causal_mask=jnp.tril(jnp.ones((cfg["max_seq_length"], cfg["max_seq_length"]), dtype=bool)),
    )


if __name__ == "__main__":
    B, S = 2, 8
    cfg = dict(CFG)
    cfg["max_seq_length"] = find_multiple(S, 8)

    key = jax.random.PRNGKey(0)
    kp, ki = jax.random.split(key)
    params = init_params(kp, cfg)

    idx = jax.random.randint(ki, (B, S), 0, cfg["vocab_size"], dtype=jnp.int32)
    input_pos = jnp.broadcast_to(jnp.arange(S, dtype=jnp.int32), (B, S))

    fwd = jax.jit(functools.partial(transformer_forward, cfg=cfg))
    logits = fwd(params, idx, input_pos)
    logits = jax.block_until_ready(logits)

    assert logits.shape == (B, S, cfg["vocab_size"]), logits.shape
    assert bool(jnp.all(jnp.isfinite(logits)))
    print("KERNEL_OK")
</pallas_src>

<mosaic_0001>
module attributes {stable_mosaic.version = 11 : i64} {
  func.func @_norm_matmul_kernel(%arg0: i32, %arg1: i32, %arg2: memref<16x32xf32, #tpu.memory_space<vmem>>, %arg3: memref<1x32xf32, #tpu.memory_space<vmem>>, %arg4: memref<32x64xbf16, #tpu.memory_space<vmem>>, %arg5: memref<16x64xf32, #tpu.memory_space<vmem>>) attributes {dimension_semantics = [#tpu.dimension_semantics<parallel>, #tpu.dimension_semantics<parallel>], iteration_bounds = array<i64: 1, 1>, scalar_prefetch = 0 : i64, scratch_operands = 0 : i64, tpu.core_type = #tpu.core_type<tc>, window_params = [{transform_indices = @transform_0, window_bounds = array<i64: 16, 32>}, {pipeline_mode = #tpu.pipeline_mode<synchronous>, transform_indices = @transform_1, window_bounds = array<i64: 1, 32>}, {transform_indices = @transform_2, window_bounds = array<i64: 32, 64>}, {transform_indices = @transform_3, window_bounds = array<i64: 16, 64>}]} {
    %c0 = arith.constant 0 : index
    %c0_0 = arith.constant 0 : index
    %0 = vector.load %arg2[%c0, %c0_0] : memref<16x32xf32, #tpu.memory_space<vmem>>, vector<16x32xf32>
    %1 = arith.mulf %0, %0 : vector<16x32xf32>
    %cst = arith.constant dense<0.000000e+00> : vector<16xf32>
    %2 = vector.multi_reduction <add>, %1, %cst [1] : vector<16x32xf32> to vector<16xf32>
    %3 = vector.shape_cast %2 : vector<16xf32> to vector<16x1xf32>
    %cst_1 = arith.constant 3.200000e+01 : f32
    %4 = vector.broadcast %cst_1 : f32 to vector<16x1xf32>
    %5 = arith.divf %3, %4 : vector<16x1xf32>
    %cst_2 = arith.constant 9.99999974E-6 : f32
    %6 = vector.broadcast %cst_2 : f32 to vector<16x1xf32>
    %7 = arith.addf %5, %6 : vector<16x1xf32>
    %8 = math.rsqrt %7 : vector<16x1xf32>
    %9 = vector.broadcast %8 : vector<16x1xf32> to vector<16x32xf32>
    %10 = arith.mulf %0, %9 : vector<16x32xf32>
    %c0_3 = arith.constant 0 : index
    %c0_4 = arith.constant 0 : index
    %11 = vector.load %arg3[%c0_3, %c0_4] : memref<1x32xf32, #tpu.memory_space<vmem>>, vector<1x32xf32>
    %12 = vector.broadcast %11 : vector<1x32xf32> to vector<16x32xf32>
    %13 = arith.mulf %10, %12 : vector<16x32xf32>
    %14 = arith.truncf %13 : vector<16x32xf32> to vector<16x32xbf16>
    %c0_5 = arith.constant 0 : index
    %c0_6 = arith.constant 0 : index
    %15 = vector.load %arg4[%c0_5, %c0_6] : memref<32x64xbf16, #tpu.memory_space<vmem>>, vector<32x64xbf16>
    %cst_7 = arith.constant dense<0.000000e+00> : vector<16x64xf32>
    %16 = tpu.matmul %14, %15, %cst_7 {dimension_numbers = #tpu.dot_dimension_numbers<[1], [0], [0], [1], [0, 0, 1, 1], [], []>} : vector<16x32xbf16>, vector<32x64xbf16>, vector<16x64xf32> -> vector<16x64xf32>
    %c0_8 = arith.constant 0 : index
    %c0_9 = arith.constant 0 : index
    %17 = vector.load %arg5[%c0_8, %c0_9] : memref<16x64xf32, #tpu.memory_space<vmem>>, vector<16x64xf32>
    tpu.vector_store %arg5[%c0_8, %c0_9], %16 {strides = array<i32>} : memref<16x64xf32, #tpu.memory_space<vmem>>, vector<16x64xf32>,
    return
  }
  func.func @transform_0(%arg0: i32, %arg1: i32) -> (i32, i32) {
    %c0_i32 = arith.constant 0 : i32
    %c0_i32_0 = arith.constant 0 : i32
    return %arg0, %c0_i32 : i32, i32
  }
  func.func @transform_1(%arg0: i32, %arg1: i32) -> (i32, i32) {
    %c0_i32 = arith.constant 0 : i32
    %c0_i32_0 = arith.constant 0 : i32
    %c0_i32_1 = arith.constant 0 : i32
    return %c0_i32, %c0_i32_0 : i32, i32
  }
  func.func @transform_2(%arg0: i32, %arg1: i32) -> (i32, i32) {
    %c0_i32 = arith.constant 0 : i32
    %c0_i32_0 = arith.constant 0 : i32
    return %c0_i32, %arg1 : i32, i32
  }
  func.func @transform_3(%arg0: i32, %arg1: i32) -> (i32, i32) {
    %c0_i32 = arith.constant 0 : i32
    return %arg0, %arg1 : i32, i32
  }
}

module attributes {stable_mosaic.version = 11 : i64} {
  func.func @_matmul_residual_kernel(%arg0: i32, %arg1: i32, %arg2: memref<16x32xf32, #tpu.memory_space<vmem>>, %arg3: memref<32x32xbf16, #tpu.memory_space<vmem>>, %arg4: memref<16x32xf32, #tpu.memory_space<vmem>>, %arg5: memref<16x32xf32, #tpu.memory_space<vmem>>) attributes {dimension_semantics = [#tpu.dimension_semantics<parallel>, #tpu.dimension_semantics<parallel>], iteration_bounds = array<i64: 1, 1>, scalar_prefetch = 0 : i64, scratch_operands = 0 : i64, tpu.core_type = #tpu.core_type<tc>, window_params = [{transform_indices = @transform_0, window_bounds = array<i64: 16, 32>}, {transform_indices = @transform_1, window_bounds = array<i64: 32, 32>}, {transform_indices = @transform_2, window_bounds = array<i64: 16, 32>}, {transform_indices = @transform_3, window_bounds = array<i64: 16, 32>}]} {
    %c0 = arith.constant 0 : index
    %c0_0 = arith.constant 0 : index
    %0 = vector.load %arg2[%c0, %c0_0] : memref<16x32xf32, #tpu.memory_space<vmem>>, vector<16x32xf32>
    %1 = arith.truncf %0 : vector<16x32xf32> to vector<16x32xbf16>
    %c0_1 = arith.constant 0 : index
    %c0_2 = arith.constant 0 : index
    %2 = vector.load %arg4[%c0_1, %c0_2] : memref<16x32xf32, #tpu.memory_space<vmem>>, vector<16x32xf32>
    %c0_3 = arith.constant 0 : index
    %c0_4 = arith.constant 0 : index
    %3 = vector.load %arg3[%c0_3, %c0_4] : memref<32x32xbf16, #tpu.memory_space<vmem>>, vector<32x32xbf16>
    %cst = arith.constant dense<0.000000e+00> : vector<16x32xf32>
    %4 = tpu.matmul %1, %3, %cst {dimension_numbers = #tpu.dot_dimension_numbers<[1], [0], [0], [1], [0, 0, 1, 1], [], []>} : vector<16x32xbf16>, vector<32x32xbf16>, vector<16x32xf32> -> vector<16x32xf32>
    %5 = arith.addf %2, %4 : vector<16x32xf32>
    %c0_5 = arith.constant 0 : index
    %c0_6 = arith.constant 0 : index
    %6 = vector.load %arg5[%c0_5, %c0_6] : memref<16x32xf32, #tpu.memory_space<vmem>>, vector<16x32xf32>
    tpu.vector_store %arg5[%c0_5, %c0_6], %5 {strides = array<i32>} : memref<16x32xf32, #tpu.memory_space<vmem>>, vector<16x32xf32>,
    return
  }
  func.func @transform_0(%arg0: i32, %arg1: i32) -> (i32, i32) {
    %c0_i32 = arith.constant 0 : i32
    %c0_i32_0 = arith.constant 0 : i32
    return %arg0, %c0_i32 : i32, i32
  }
  func.func @transform_1(%arg0: i32, %arg1: i32) -> (i32, i32) {
    %c0_i32 = arith.constant 0 : i32
    %c0_i32_0 = arith.constant 0 : i32
    return %c0_i32, %arg1 : i32, i32
  }
  func.func @transform_2(%arg0: i32, %arg1: i32) -> (i32, i32) {
    %c0_i32 = arith.constant 0 : i32
    return %arg0, %arg1 : i32, i32
  }
  func.func @transform_3(%arg0: i32, %arg1: i32) -> (i32, i32) {
    %c0_i32 = arith.constant 0 : i32
    return %arg0, %arg1 : i32, i32
  }
}

module attributes {stable_mosaic.version = 11 : i64} {
  func.func @_attention_kernel(%arg0: i32, %arg1: memref<1x8x32xf32, #tpu.memory_space<vmem>>, %arg2: memref<1x8x16xf32, #tpu.memory_space<vmem>>, %arg3: memref<1x8x16xf32, #tpu.memory_space<vmem>>, %arg4: memref<1x8x8xf32, #tpu.memory_space<vmem>>, %arg5: memref<1x8x8xf32, #tpu.memory_space<vmem>>, %arg6: memref<1x8x8xf32, #tpu.memory_space<vmem>>, %arg7: memref<1x8x32xf32, #tpu.memory_space<vmem>>) attributes {dimension_semantics = [#tpu.dimension_semantics<parallel>], iteration_bounds = array<i64: 2>, scalar_prefetch = 0 : i64, scratch_operands = 0 : i64, tpu.core_type = #tpu.core_type<tc>, window_params = [{transform_indices = @transform_0, window_bounds = array<i64: 1, 8, 32>}, {transform_indices = @transform_1, window_bounds = array<i64: 1, 8, 16>}, {transform_indices = @transform_2, window_bounds = array<i64: 1, 8, 16>}, {transform_indices = @transform_3, window_bounds = array<i64: 1, 8, 8>}, {transform_indices = @transform_4, window_bounds = array<i64: 1, 8, 8>}, {transform_indices = @transform_5, window_bounds = array<i64: 1, 8, 8>}, {transform_indices = @transform_6, window_bounds = array<i64: 1, 8, 32>}]} {
    %c0 = arith.constant 0 : index
    %c0_0 = arith.constant 0 : index
    %c0_1 = arith.constant 0 : index
    %0 = vector.load %arg1[%c0, %c0_0, %c0_1] : memref<1x8x32xf32, #tpu.memory_space<vmem>>, vector<1x8x32xf32>
    %1 = vector.shape_cast %0 : vector<1x8x32xf32> to vector<8x32xf32>
    %c0_2 = arith.constant 0 : index
    %c0_3 = arith.constant 0 : index
    %c0_4 = arith.constant 0 : index
    %2 = vector.load %arg2[%c0_2, %c0_3, %c0_4] : memref<1x8x16xf32, #tpu.memory_space<vmem>>, vector<1x8x16xf32>
    %3 = vector.shape_cast %2 : vector<1x8x16xf32> to vector<8x16xf32>
    %c0_5 = arith.constant 0 : index
    %c0_6 = arith.constant 0 : index
    %c0_7 = arith.constant 0 : index
    %4 = vector.load %arg3[%c0_5, %c0_6, %c0_7] : memref<1x8x16xf32, #tpu.memory_space<vmem>>, vector<1x8x16xf32>
    %5 = vector.shape_cast %4 : vector<1x8x16xf32> to vector<8x16xf32>
    %c0_8 = arith.constant 0 : index
    %c0_9 = arith.constant 0 : index
    %c0_10 = arith.constant 0 : index
    %6 = vector.load %arg4[%c0_8, %c0_9, %c0_10] : memref<1x8x8xf32, #tpu.memory_space<vmem>>, vector<1x8x8xf32>
    %7 = vector.shape_cast %6 : vector<1x8x8xf32> to vector<8x8xf32>
    %c0_11 = arith.constant 0 : index
    %c0_12 = arith.constant 0 : index
    %c0_13 = arith.constant 0 : index
    %8 = vector.load %arg5[%c0_11, %c0_12, %c0_13] : memref<1x8x8xf32, #tpu.memory_space<vmem>>, vector<1x8x8xf32>
    %9 = vector.shape_cast %8 : vector<1x8x8xf32> to vector<8x8xf32>
    %c0_14 = arith.constant 0 : index
    %c0_15 = arith.constant 0 : index
    %c0_16 = arith.constant 0 : index
    %10 = vector.load %arg6[%c0_14, %c0_15, %c0_16] : memref<1x8x8xf32, #tpu.memory_space<vmem>>, vector<1x8x8xf32>
    %11 = vector.shape_cast %10 : vector<1x8x8xf32> to vector<8x8xf32>
    %12 = tpu.iota {dimensions = array<i32: 0>} : vector<32x32xi32>
    %13 = tpu.iota {dimensions = array<i32: 1>} : vector<32x32xi32>
    %c2_i32 = arith.constant 2 : i32
    %c0_i32 = arith.constant 0 : i32
    %14 = arith.cmpi eq, %c2_i32, %c0_i32 : i32
    %c1_i32 = arith.constant 1 : i32
    %15 = arith.select %14, %c1_i32, %c2_i32 : i32
    %16 = vector.broadcast %15 : i32 to vector<32x32xi32>
    %17 = arith.remsi %13, %16 : vector<32x32xi32>
    %c0_i32_17 = arith.constant 0 : i32
    %18 = vector.broadcast %c0_i32_17 : i32 to vector<32x32xi32>
    %19 = arith.cmpi ne, %17, %18 : vector<32x32xi32>
    %c0_i32_18 = arith.constant 0 : i32
    %20 = vector.broadcast %c0_i32_18 : i32 to vector<32x32xi32>
    %21 = arith.cmpi slt, %17, %20 : vector<32x32xi32>
    %c0_i32_19 = arith.constant 0 : i32
    %22 = arith.cmpi slt, %15, %c0_i32_19 : i32
    %23 = vector.broadcast %22 : i1 to vector<32x32xi1>
    %24 = vector.broadcast %23 : vector<32x32xi1> to vector<32x32xi1>
    %25 = arith.xori %21, %24 : vector<32x32xi1>
    %26 = arith.andi %25, %19 : vector<32x32xi1>
    %27 = vector.broadcast %15 : i32 to vector<32x32xi32>
    %28 = arith.addi %17, %27 : vector<32x32xi32>
    %29 = arith.select %26, %28, %17 : vector<32x32xi1>, vector<32x32xi32>
    %c0_i32_20 = arith.constant 0 : i32
    %30 = vector.broadcast %c0_i32_20 : i32 to vector<32x32xi32>
    %31 = arith.cmpi eq, %29, %30 : vector<32x32xi32>
    %c1_i32_21 = arith.constant 1 : i32
    %32 = vector.broadcast %c1_i32_21 : i32 to vector<32x32xi32>
    %33 = arith.addi %13, %32 : vector<32x32xi32>
    %34 = arith.cmpi eq, %12, %33 : vector<32x32xi32>
    %35 = arith.andi %31, %34 : vector<32x32xi1>
    %cst = arith.constant -1.000000e+00 : f32
    %cst_22 = arith.constant 0.000000e+00 : f32
    %36 = vector.broadcast %cst : f32 to vector<32x32xf32>
    %37 = vector.broadcast %cst_22 : f32 to vector<32x32xf32>
    %38 = arith.select %35, %36, %37 : vector<32x32xi1>, vector<32x32xf32>
    %c2_i32_23 = arith.constant 2 : i32
    %c0_i32_24 = arith.constant 0 : i32
    %39 = arith.cmpi eq, %c2_i32_23, %c0_i32_24 : i32
    %c1_i32_25 = arith.constant 1 : i32
    %40 = arith.select %39, %c1_i32_25, %c2_i32_23 : i32
    %41 = vector.broadcast %40 : i32 to vector<32x32xi32>
    %42 = arith.remsi %13, %41 : vector<32x32xi32>
    %c0_i32_26 = arith.constant 0 : i32
    %43 = vector.broadcast %c0_i32_26 : i32 to vector<32x32xi32>
    %44 = arith.cmpi ne, %42, %43 : vector<32x32xi32>
    %c0_i32_27 = arith.constant 0 : i32
    %45 = vector.broadcast %c0_i32_27 : i32 to vector<32x32xi32>
    %46 = arith.cmpi slt, %42, %45 : vector<32x32xi32>
    %c0_i32_28 = arith.constant 0 : i32
    %47 = arith.cmpi slt, %40, %c0_i32_28 : i32
    %48 = vector.broadcast %47 : i1 to vector<32x32xi1>
    %49 = vector.broadcast %48 : vector<32x32xi1> to vector<32x32xi1>
    %50 = arith.xori %46, %49 : vector<32x32xi1>
    %51 = arith.andi %50, %44 : vector<32x32xi1>
    %52 = vector.broadcast %40 : i32 to vector<32x32xi32>
    %53 = arith.addi %42, %52 : vector<32x32xi32>
    %54 = arith.select %51, %53, %42 : vector<32x32xi1>, vector<32x32xi32>
    %c1_i32_29 = arith.constant 1 : i32
    %55 = vector.broadcast %c1_i32_29 : i32 to vector<32x32xi32>
    %56 = arith.cmpi eq, %54, %55 : vector<32x32xi32>
    %c1_i32_30 = arith.constant 1 : i32
    %57 = vector.broadcast %c1_i32_30 : i32 to vector<32x32xi32>
    %58 = arith.subi %13, %57 : vector<32x32xi32>
    %59 = arith.cmpi eq, %12, %58 : vector<32x32xi32>
    %60 = arith.andi %56, %59 : vector<32x32xi1>
    %cst_31 = arith.constant 1.000000e+00 : f32
    %cst_32 = arith.constant 0.000000e+00 : f32
    %61 = vector.broadcast %cst_31 : f32 to vector<32x32xf32>
    %62 = vector.broadcast %cst_32 : f32 to vector<32x32xf32>
    %63 = arith.select %60, %61, %62 : vector<32x32xi1>, vector<32x32xf32>
    %64 = arith.addf %38, %63 : vector<32x32xf32>
    %65 = tpu.concatenate %7, %7, %7, %7 in 1 : vector<8x8xf32>, vector<8x8xf32>, vector<8x8xf32>, vector<8x8xf32> -> vector<8x32xf32>
    %66 = tpu.concatenate %9, %9, %9, %9 in 1 : vector<8x8xf32>, vector<8x8xf32>, vector<8x8xf32>, vector<8x8xf32> -> vector<8x32xf32>
    %cst_33 = arith.constant dense<0.000000e+00> : vector<8x32xf32>
    %67 = tpu.matmul %1, %64, %cst_33 {dimension_numbers = #tpu.dot_dimension_numbers<[1], [0], [0], [1], [0, 0, 1, 1], [], []>} : vector<8x32xf32>, vector<32x32xf32>, vector<8x32xf32> -> vector<8x32xf32>
    %68 = arith.mulf %1, %65 : vector<8x32xf32>
    %69 = arith.mulf %67, %66 : vector<8x32xf32>
    %70 = arith.addf %68, %69 : vector<8x32xf32>
    %cst_34 = arith.constant 0.353553385 : f32
    %71 = vector.broadcast %cst_34 : f32 to vector<8x32xf32>
    %72 = arith.mulf %70, %71 : vector<8x32xf32>
    %73 = tpu.iota {dimensions = array<i32: 0>} : vector<16x16xi32>
    %74 = tpu.iota {dimensions = array<i32: 1>} : vector<16x16xi32>
    %c2_i32_35 = arith.constant 2 : i32
    %c0_i32_36 = arith.constant 0 : i32
    %75 = arith.cmpi eq, %c2_i32_35, %c0_i32_36 : i32
    %c1_i32_37 = arith.constant 1 : i32
    %76 = arith.select %75, %c1_i32_37, %c2_i32_35 : i32
    %77 = vector.broadcast %76 : i32 to vector<16x16xi32>
    %78 = arith.remsi %74, %77 : vector<16x16xi32>
    %c0_i32_38 = arith.constant 0 : i32
    %79 = vector.broadcast %c0_i32_38 : i32 to vector<16x16xi32>
    %80 = arith.cmpi ne, %78, %79 : vector<16x16xi32>
    %c0_i32_39 = arith.constant 0 : i32
    %81 = vector.broadcast %c0_i32_39 : i32 to vector<16x16xi32>
    %82 = arith.cmpi slt, %78, %81 : vector<16x16xi32>
    %c0_i32_40 = arith.constant 0 : i32
    %83 = arith.cmpi slt, %76, %c0_i32_40 : i32
    %84 = vector.broadcast %83 : i1 to vector<16x16xi1>
    %85 = vector.broadcast %84 : vector<16x16xi1> to vector<16x16xi1>
    %86 = arith.xori %82, %85 : vector<16x16xi1>
    %87 = arith.andi %86, %80 : vector<16x16xi1>
    %88 = vector.broadcast %76 : i32 to vector<16x16xi32>
    %89 = arith.addi %78, %88 : vector<16x16xi32>
    %90 = arith.select %87, %89, %78 : vector<16x16xi1>, vector<16x16xi32>
    %c0_i32_41 = arith.constant 0 : i32
    %91 = vector.broadcast %c0_i32_41 : i32 to vector<16x16xi32>
    %92 = arith.cmpi eq, %90, %91 : vector<16x16xi32>
    %c1_i32_42 = arith.constant 1 : i32
    %93 = vector.broadcast %c1_i32_42 : i32 to vector<16x16xi32>
    %94 = arith.addi %74, %93 : vector<16x16xi32>
    %95 = arith.cmpi eq, %73, %94 : vector<16x16xi32>
    %96 = arith.andi %92, %95 : vector<16x16xi1>
    %cst_43 = arith.constant -1.000000e+00 : f32
    %cst_44 = arith.constant 0.000000e+00 : f32
    %97 = vector.broadcast %cst_43 : f32 to vector<16x16xf32>
    %98 = vector.broadcast %cst_44 : f32 to vector<16x16xf32>
    %99 = arith.select %96, %97, %98 : vector<16x16xi1>, vector<16x16xf32>
    %c2_i32_45 = arith.constant 2 : i32
    %c0_i32_46 = arith.constant 0 : i32
    %100 = arith.cmpi eq, %c2_i32_45, %c0_i32_46 : i32
    %c1_i32_47 = arith.constant 1 : i32
    %101 = arith.select %100, %c1_i32_47, %c2_i32_45 : i32
    %102 = vector.broadcast %101 : i32 to vector<16x16xi32>
    %103 = arith.remsi %74, %102 : vector<16x16xi32>
    %c0_i32_48 = arith.constant 0 : i32
    %104 = vector.broadcast %c0_i32_48 : i32 to vector<16x16xi32>
    %105 = arith.cmpi ne, %103, %104 : vector<16x16xi32>
    %c0_i32_49 = arith.constant 0 : i32
    %106 = vector.broadcast %c0_i32_49 : i32 to vector<16x16xi32>
    %107 = arith.cmpi slt, %103, %106 : vector<16x16xi32>
    %c0_i32_50 = arith.constant 0 : i32
    %108 = arith.cmpi slt, %101, %c0_i32_50 : i32
    %109 = vector.broadcast %108 : i1 to vector<16x16xi1>
    %110 = vector.broadcast %109 : vector<16x16xi1> to vector<16x16xi1>
    %111 = arith.xori %107, %110 : vector<16x16xi1>
    %112 = arith.andi %111, %105 : vector<16x16xi1>
    %113 = vector.broadcast %101 : i32 to vector<16x16xi32>
    %114 = arith.addi %103, %113 : vector<16x16xi32>
    %115 = arith.select %112, %114, %103 : vector<16x16xi1>, vector<16x16xi32>
    %c1_i32_51 = arith.constant 1 : i32
    %116 = vector.broadcast %c1_i32_51 : i32 to vector<16x16xi32>
    %117 = arith.cmpi eq, %115, %116 : vector<16x16xi32>
    %c1_i32_52 = arith.constant 1 : i32
    %118 = vector.broadcast %c1_i32_52 : i32 to vector<16x16xi32>
    %119 = arith.subi %74, %118 : vector<16x16xi32>
    %120 = arith.cmpi eq, %73, %119 : vector<16x16xi32>
    %121 = arith.andi %117, %120 : vector<16x16xi1>
    %cst_53 = arith.constant 1.000000e+00 : f32
    %cst_54 = arith.constant 0.000000e+00 : f32
    %122 = vector.broadcast %cst_53 : f32 to vector<16x16xf32>
    %123 = vector.broadcast %cst_54 : f32 to vector<16x16xf32>
    %124 = arith.select %121, %122, %123 : vector<16x16xi1>, vector<16x16xf32>
    %125 = arith.addf %99, %124 : vector<16x16xf32>
    %126 = tpu.concatenate %7, %7 in 1 : vector<8x8xf32>, vector<8x8xf32> -> vector<8x16xf32>
    %127 = tpu.concatenate %9, %9 in 1 : vector<8x8xf32>, vector<8x8xf32> -> vector<8x16xf32>
    %cst_55 = arith.constant dense<0.000000e+00> : vector<8x16xf32>
    %128 = tpu.matmul %3, %125, %cst_55 {dimension_numbers = #tpu.dot_dimension_numbers<[1], [0], [0], [1], [0, 0, 1, 1], [], []>} : vector<8x16xf32>, vector<16x16xf32>, vector<8x16xf32> -> vector<8x16xf32>
    %129 = arith.mulf %3, %126 : vector<8x16xf32>
    %130 = arith.mulf %128, %127 : vector<8x16xf32>
    %131 = arith.addf %129, %130 : vector<8x16xf32>
    %132 = vector.extract_strided_slice %72 {offsets = [0, 0], sizes = [8, 8], strides = [1, 1]} : vector<8x32xf32> to vector<8x8xf32>
    %133 = vector.extract_strided_slice %72 {offsets = [0, 8], sizes = [8, 8], strides = [1, 1]} : vector<8x32xf32> to vector<8x8xf32>
    %134 = vector.extract_strided_slice %72 {offsets = [0, 16], sizes = [8, 8], strides = [1, 1]} : vector<8x32xf32> to vector<8x8xf32>
    %135 = vector.extract_strided_slice %72 {offsets = [0, 24], sizes = [8, 8], strides = [1, 1]} : vector<8x32xf32> to vector<8x8xf32>
    %136 = vector.shape_cast %132 : vector<8x8xf32> to vector<1x8x8xf32>
    %137 = vector.shape_cast %133 : vector<8x8xf32> to vector<1x8x8xf32>
    %138 = vector.shape_cast %134 : vector<8x8xf32> to vector<1x8x8xf32>
    %139 = vector.shape_cast %135 : vector<8x8xf32> to vector<1x8x8xf32>
    %140 = tpu.concatenate %136, %137, %138, %139 in 0 : vector<1x8x8xf32>, vector<1x8x8xf32>, vector<1x8x8xf32>, vector<1x8x8xf32> -> vector<4x8x8xf32>
    %141 = vector.extract_strided_slice %131 {offsets = [0, 0], sizes = [8, 8], strides = [1, 1]} : vector<8x16xf32> to vector<8x8xf32>
    %142 = vector.extract_strided_slice %131 {offsets = [0, 0], sizes = [8, 8], strides = [1, 1]} : vector<8x16xf32> to vector<8x8xf32>
    %143 = vector.extract_strided_slice %131 {offsets = [0, 8], sizes = [8, 8], strides = [1, 1]} : vector<8x16xf32> to vector<8x8xf32>
    %144 = vector.extract_strided_slice %131 {offsets = [0, 8], sizes = [8, 8], strides = [1, 1]} : vector<8x16xf32> to vector<8x8xf32>
    %145 = vector.shape_cast %141 : vector<8x8xf32> to vector<1x8x8xf32>
    %146 = vector.shape_cast %142 : vector<8x8xf32> to vector<1x8x8xf32>
    %147 = vector.shape_cast %143 : vector<8x8xf32> to vector<1x8x8xf32>
    %148 = vector.shape_cast %144 : vector<8x8xf32> to vector<1x8x8xf32>
    %149 = tpu.concatenate %145, %146, %147, %148 in 0 : vector<1x8x8xf32>, vector<1x8x8xf32>, vector<1x8x8xf32>, vector<1x8x8xf32> -> vector<4x8x8xf32>
    %150 = vector.extract_strided_slice %5 {offsets = [0, 0], sizes = [8, 8], strides = [1, 1]} : vector<8x16xf32> to vector<8x8xf32>
    %151 = vector.extract_strided_slice %5 {offsets = [0, 0], sizes = [8, 8], strides = [1, 1]} : vector<8x16xf32> to vector<8x8xf32>
    %152 = vector.extract_strided_slice %5 {offsets = [0, 8], sizes = [8, 8], strides = [1, 1]} : vector<8x16xf32> to vector<8x8xf32>
    %153 = vector.extract_strided_slice %5 {offsets = [0, 8], sizes = [8, 8], strides = [1, 1]} : vector<8x16xf32> to vector<8x8xf32>
    %154 = vector.shape_cast %150 : vector<8x8xf32> to vector<1x8x8xf32>
    %155 = vector.shape_cast %151 : vector<8x8xf32> to vector<1x8x8xf32>
    %156 = vector.shape_cast %152 : vector<8x8xf32> to vector<1x8x8xf32>
    %157 = vector.shape_cast %153 : vector<8x8xf32> to vector<1x8x8xf32>
    %158 = tpu.concatenate %154, %155, %156, %157 in 0 : vector<1x8x8xf32>, vector<1x8x8xf32>, vector<1x8x8xf32>, vector<1x8x8xf32> -> vector<4x8x8xf32>
    %159 = arith.truncf %140 : vector<4x8x8xf32> to vector<4x8x8xbf16>
    %160 = arith.truncf %149 : vector<4x8x8xf32> to vector<4x8x8xbf16>
    "tpu.trace_start"() <{level = 10 : i32, message = "hqd,hkd->hqk"}> : () -> ()
    %cst_56 = arith.constant dense<0.000000e+00> : vector<4x8x8xf32>
    %161 = tpu.matmul %159, %160, %cst_56 {dimension_numbers = #tpu.dot_dimension_numbers<[2], [2], [1], [1], [0, 0, 0, 1, 1, 1], [0], [0]>} : vector<4x8x8xbf16>, vector<4x8x8xbf16>, vector<4x8x8xf32> -> vector<4x8x8xf32>
    "tpu.trace_stop"() : () -> ()
    %162 = vector.shape_cast %11 : vector<8x8xf32> to vector<1x8x8xf32>
    %163 = vector.broadcast %162 : vector<1x8x8xf32> to vector<4x8x8xf32>
    %164 = arith.addf %161, %163 : vector<4x8x8xf32>
    %cst_57 = arith.constant dense<0xFF800000> : vector<4x8xf32>
    %165 = vector.multi_reduction <maximumf>, %164, %cst_57 [2] : vector<4x8x8xf32> to vector<4x8xf32>
    %166 = vector.shape_cast %165 : vector<4x8xf32> to vector<4x8x1xf32>
    %167 = vector.broadcast %166 : vector<4x8x1xf32> to vector<4x8x8xf32>
    %168 = arith.subf %164, %167 : vector<4x8x8xf32>
    %169 = math.exp %168 : vector<4x8x8xf32>
    %cst_58 = arith.constant dense<0.000000e+00> : vector<4x8xf32>
    %170 = vector.multi_reduction <add>, %169, %cst_58 [2] : vector<4x8x8xf32> to vector<4x8xf32>
    %171 = vector.shape_cast %170 : vector<4x8xf32> to vector<4x8x1xf32>
    %172 = arith.truncf %169 : vector<4x8x8xf32> to vector<4x8x8xbf16>
    %173 = arith.truncf %158 : vector<4x8x8xf32> to vector<4x8x8xbf16>
    "tpu.trace_start"() <{level = 10 : i32, message = "hqk,hkd->hqd"}> : () -> ()
    %cst_59 = arith.constant dense<0.000000e+00> : vector<4x8x8xf32>
    %174 = tpu.matmul %172, %173, %cst_59 {dimension_numbers = #tpu.dot_dimension_numbers<[2], [1], [1], [2], [0, 0, 0, 1, 1, 2], [0], [0]>} : vector<4x8x8xbf16>, vector<4x8x8xbf16>, vector<4x8x8xf32> -> vector<4x8x8xf32>
    "tpu.trace_stop"() : () -> ()
    %175 = tpu.reciprocal %171 {approx = true} : vector<4x8x1xf32> -> vector<4x8x1xf32>
    %176 = vector.broadcast %175 : vector<4x8x1xf32> to vector<4x8x8xf32>
    %177 = arith.mulf %174, %176 : vector<4x8x8xf32>
    %178 = vector.extract_strided_slice %177 {offsets = [0, 0, 0], sizes = [1, 8, 8], strides = [1, 1, 1]} : vector<4x8x8xf32> to vector<1x8x8xf32>
    %179 = vector.shape_cast %178 : vector<1x8x8xf32> to vector<8x8xf32>
    %180 = vector.extract_strided_slice %177 {offsets = [1, 0, 0], sizes = [1, 8, 8], strides = [1, 1, 1]} : vector<4x8x8xf32> to vector<1x8x8xf32>
    %181 = vector.shape_cast %180 : vector<1x8x8xf32> to vector<8x8xf32>
    %182 = vector.extract_strided_slice %177 {offsets = [2, 0, 0], sizes = [1, 8, 8], strides = [1, 1, 1]} : vector<4x8x8xf32> to vector<1x8x8xf32>
    %183 = vector.shape_cast %182 : vector<1x8x8xf32> to vector<8x8xf32>
    %184 = vector.extract_strided_slice %177 {offsets = [3, 0, 0], sizes = [1, 8, 8], strides = [1, 1, 1]} : vector<4x8x8xf32> to vector<1x8x8xf32>
    %185 = vector.shape_cast %184 : vector<1x8x8xf32> to vector<8x8xf32>
    %186 = tpu.concatenate %179, %181, %183, %185 in 1 : vector<8x8xf32>, vector<8x8xf32>, vector<8x8xf32>, vector<8x8xf32> -> vector<8x32xf32>
    %c0_60 = arith.constant 0 : index
    %c0_61 = arith.constant 0 : index
    %c0_62 = arith.constant 0 : index
    %187 = vector.load %arg7[%c0_60, %c0_61, %c0_62] : memref<1x8x32xf32, #tpu.memory_space<vmem>>, vector<1x8x32xf32>
    %188 = vector.shape_cast %187 : vector<1x8x32xf32> to vector<8x32xf32>
    %189 = vector.shape_cast %186 : vector<8x32xf32> to vector<1x8x32xf32>
    tpu.vector_store %arg7[%c0_60, %c0_61, %c0_62], %189 {strides = array<i32>} : memref<1x8x32xf32, #tpu.memory_space<vmem>>, vector<1x8x32xf32>,
    return
  }
  func.func @transform_0(%arg0: i32) -> (i32, i32, i32) {
    %c0_i32 = arith.constant 0 : i32
    %c0_i32_0 = arith.constant 0 : i32
    %c0_i32_1 = arith.constant 0 : i32
    return %arg0, %c0_i32, %c0_i32_0 : i32, i32, i32
  }
  func.func @transform_1(%arg0: i32) -> (i32, i32, i32) {
    %c0_i32 = arith.constant 0 : i32
    %c0_i32_0 = arith.constant 0 : i32
    %c0_i32_1 = arith.constant 0 : i32
    return %arg0, %c0_i32, %c0_i32_0 : i32, i32, i32
  }
  func.func @transform_2(%arg0: i32) -> (i32, i32, i32) {
    %c0_i32 = arith.constant 0 : i32
    %c0_i32_0 = arith.constant 0 : i32
    %c0_i32_1 = arith.constant 0 : i32
    return %arg0, %c0_i32, %c0_i32_0 : i32, i32, i32
  }
  func.func @transform_3(%arg0: i32) -> (i32, i32, i32) {
    %c0_i32 = arith.constant 0 : i32
    %c0_i32_0 = arith.constant 0 : i32
    %c0_i32_1 = arith.constant 0 : i32
    return %arg0, %c0_i32, %c0_i32_0 : i32, i32, i32
  }
  func.func @transform_4(%arg0: i32) -> (i32, i32, i32) {
    %c0_i32 = arith.constant 0 : i32
    %c0_i32_0 = arith.constant 0 : i32
    %c0_i32_1 = arith.constant 0 : i32
    return %arg0, %c0_i32, %c0_i32_0 : i32, i32, i32
  }
  func.func @transform_5(%arg0: i32) -> (i32, i32, i32) {
    %c0_i32 = arith.constant 0 : i32
    %c0_i32_0 = arith.constant 0 : i32
    %c0_i32_1 = arith.constant 0 : i32
    return %arg0, %c0_i32, %c0_i32_0 : i32, i32, i32
  }
  func.func @transform_6(%arg0: i32) -> (i32, i32, i32) {
    %c0_i32 = arith.constant 0 : i32
    %c0_i32_0 = arith.constant 0 : i32
    %c0_i32_1 = arith.constant 0 : i32
    return %arg0, %c0_i32, %c0_i32_0 : i32, i32, i32
  }
}

module attributes {stable_mosaic.version = 11 : i64} {
  func.func @_ffn_kernel(%arg0: i32, %arg1: i32, %arg2: memref<16x32xf32, #tpu.memory_space<vmem>>, %arg3: memref<1x32xf32, #tpu.memory_space<vmem>>, %arg4: memref<32x64xbf16, #tpu.memory_space<vmem>>, %arg5: memref<32x64xbf16, #tpu.memory_space<vmem>>, %arg6: memref<64x32xbf16, #tpu.memory_space<vmem>>, %arg7: memref<16x32xf32, #tpu.memory_space<vmem>>, %arg8: memref<16x32xbf16, #tpu.memory_space<vmem>>) attributes {dimension_semantics = [#tpu.dimension_semantics<parallel>, #tpu.dimension_semantics<arbitrary>], iteration_bounds = array<i64: 1, 1>, scalar_prefetch = 0 : i64, scratch_operands = 1 : i64, tpu.core_type = #tpu.core_type<tc>, window_params = [{transform_indices = @transform_0, window_bounds = array<i64: 16, 32>}, {pipeline_mode = #tpu.pipeline_mode<synchronous>, transform_indices = @transform_1, window_bounds = array<i64: 1, 32>}, {transform_indices = @transform_2, window_bounds = array<i64: 32, 64>}, {transform_indices = @transform_3, window_bounds = array<i64: 32, 64>}, {transform_indices = @transform_4, window_bounds = array<i64: 64, 32>}, {transform_indices = @transform_5, window_bounds = array<i64: 16, 32>}]} {
    %c0_i32 = arith.constant 0 : i32
    %0 = arith.cmpi eq, %arg1, %c0_i32 : i32
    %1 = arith.extui %0 : i1 to i32
    %c0_i32_0 = arith.constant 0 : i32
    %2 = arith.cmpi ne, %1, %c0_i32_0 : i32
    scf.if %2 {
      %c0_15 = arith.constant 0 : index
      %c0_16 = arith.constant 0 : index
      %21 = vector.load %arg2[%c0_15, %c0_16] : memref<16x32xf32, #tpu.memory_space<vmem>>, vector<16x32xf32>
      %22 = arith.mulf %21, %21 : vector<16x32xf32>
      %cst_17 = arith.constant dense<0.000000e+00> : vector<16xf32>
      %23 = vector.multi_reduction <add>, %22, %cst_17 [1] : vector<16x32xf32> to vector<16xf32>
      %24 = vector.shape_cast %23 : vector<16xf32> to vector<16x1xf32>
      %cst_18 = arith.constant 3.200000e+01 : f32
      %25 = vector.broadcast %cst_18 : f32 to vector<16x1xf32>
      %26 = arith.divf %24, %25 : vector<16x1xf32>
      %cst_19 = arith.constant 9.99999974E-6 : f32
      %27 = vector.broadcast %cst_19 : f32 to vector<16x1xf32>
      %28 = arith.addf %26, %27 : vector<16x1xf32>
      %29 = math.rsqrt %28 : vector<16x1xf32>
      %30 = vector.broadcast %29 : vector<16x1xf32> to vector<16x32xf32>
      %31 = arith.mulf %21, %30 : vector<16x32xf32>
      %c0_20 = arith.constant 0 : index
      %c0_21 = arith.constant 0 : index
      %32 = vector.load %arg3[%c0_20, %c0_21] : memref<1x32xf32, #tpu.memory_space<vmem>>, vector<1x32xf32>
      %33 = vector.broadcast %32 : vector<1x32xf32> to vector<16x32xf32>
      %34 = arith.mulf %31, %33 : vector<16x32xf32>
      %35 = arith.truncf %34 : vector<16x32xf32> to vector<16x32xbf16>
      %c0_22 = arith.constant 0 : index
      %c0_23 = arith.constant 0 : index
      %36 = vector.load %arg8[%c0_22, %c0_23] : memref<16x32xbf16, #tpu.memory_space<vmem>>, vector<16x32xbf16>
      tpu.vector_store %arg8[%c0_22, %c0_23], %35 {strides = array<i32>} : memref<16x32xbf16, #tpu.memory_space<vmem>>, vector<16x32xbf16>,
      %c0_24 = arith.constant 0 : index
      %c0_25 = arith.constant 0 : index
      %37 = vector.load %arg7[%c0_24, %c0_25] : memref<16x32xf32, #tpu.memory_space<vmem>>, vector<16x32xf32>
      tpu.vector_store %arg7[%c0_24, %c0_25], %21 {strides = array<i32>} : memref<16x32xf32, #tpu.memory_space<vmem>>, vector<16x32xf32>,
    } else {
    }
    %c0 = arith.constant 0 : index
    %c0_1 = arith.constant 0 : index
    %3 = vector.load %arg8[%c0, %c0_1] : memref<16x32xbf16, #tpu.memory_space<vmem>>, vector<16x32xbf16>
    %c0_2 = arith.constant 0 : index
    %c0_3 = arith.constant 0 : index
    %4 = vector.load %arg4[%c0_2, %c0_3] : memref<32x64xbf16, #tpu.memory_space<vmem>>, vector<32x64xbf16>
    %cst = arith.constant dense<0.000000e+00> : vector<16x64xf32>
    %5 = tpu.matmul %3, %4, %cst {dimension_numbers = #tpu.dot_dimension_numbers<[1], [0], [0], [1], [0, 0, 1, 1], [], []>} : vector<16x32xbf16>, vector<32x64xbf16>, vector<16x64xf32> -> vector<16x64xf32>
    %c0_4 = arith.constant 0 : index
    %c0_5 = arith.constant 0 : index
    %6 = vector.load %arg5[%c0_4, %c0_5] : memref<32x64xbf16, #tpu.memory_space<vmem>>, vector<32x64xbf16>
    %cst_6 = arith.constant dense<0.000000e+00> : vector<16x64xf32>
    %7 = tpu.matmul %3, %6, %cst_6 {dimension_numbers = #tpu.dot_dimension_numbers<[1], [0], [0], [1], [0, 0, 1, 1], [], []>} : vector<16x32xbf16>, vector<32x64xbf16>, vector<16x64xf32> -> vector<16x64xf32>
    %8 = arith.negf %5 : vector<16x64xf32>
    %9 = math.exp %8 : vector<16x64xf32>
    %cst_7 = arith.constant 1.000000e+00 : f32
    %10 = vector.broadcast %cst_7 : f32 to vector<16x64xf32>
    %11 = arith.addf %10, %9 : vector<16x64xf32>
    %12 = arith.divf %10, %11 : vector<16x64xf32>
    %13 = arith.mulf %5, %12 : vector<16x64xf32>
    %14 = arith.mulf %13, %7 : vector<16x64xf32>
    %c0_8 = arith.constant 0 : index
    %c0_9 = arith.constant 0 : index
    %15 = vector.load %arg7[%c0_8, %c0_9] : memref<16x32xf32, #tpu.memory_space<vmem>>, vector<16x32xf32>
    %16 = arith.truncf %14 : vector<16x64xf32> to vector<16x64xbf16>
    %c0_10 = arith.constant 0 : index
    %c0_11 = arith.constant 0 : index
    %17 = vector.load %arg6[%c0_10, %c0_11] : memref<64x32xbf16, #tpu.memory_space<vmem>>, vector<64x32xbf16>
    %cst_12 = arith.constant dense<0.000000e+00> : vector<16x32xf32>
    %18 = tpu.matmul %16, %17, %cst_12 {dimension_numbers = #tpu.dot_dimension_numbers<[1], [0], [0], [1], [0, 0, 1, 1], [], []>} : vector<16x64xbf16>, vector<64x32xbf16>, vector<16x32xf32> -> vector<16x32xf32>
    %19 = arith.addf %15, %18 : vector<16x32xf32>
    %c0_13 = arith.constant 0 : index
    %c0_14 = arith.constant 0 : index
    %20 = vector.load %arg7[%c0_13, %c0_14] : memref<16x32xf32, #tpu.memory_space<vmem>>, vector<16x32xf32>
    tpu.vector_store %arg7[%c0_13, %c0_14], %19 {strides = array<i32>} : memref<16x32xf32, #tpu.memory_space<vmem>>, vector<16x32xf32>,
    return
  }
  func.func @transform_0(%arg0: i32, %arg1: i32) -> (i32, i32) {
    %c0_i32 = arith.constant 0 : i32
    %c0_i32_0 = arith.constant 0 : i32
    return %arg0, %c0_i32 : i32, i32
  }
  func.func @transform_1(%arg0: i32, %arg1: i32) -> (i32, i32) {
    %c0_i32 = arith.constant 0 : i32
    %c0_i32_0 = arith.constant 0 : i32
    %c0_i32_1 = arith.constant 0 : i32
    return %c0_i32, %c0_i32_0 : i32, i32
  }
  func.func @transform_2(%arg0: i32, %arg1: i32) -> (i32, i32) {
    %c0_i32 = arith.constant 0 : i32
    %c0_i32_0 = arith.constant 0 : i32
    return %c0_i32, %arg1 : i32, i32
  }
  func.func @transform_3(%arg0: i32, %arg1: i32) -> (i32, i32) {
    %c0_i32 = arith.constant 0 : i32
    %c0_i32_0 = arith.constant 0 : i32
    return %c0_i32, %arg1 : i32, i32
  }
  func.func @transform_4(%arg0: i32, %arg1: i32) -> (i32, i32) {
    %c0_i32 = arith.constant 0 : i32
    %c0_i32_0 = arith.constant 0 : i32
    return %arg1, %c0_i32 : i32, i32
  }
  func.func @transform_5(%arg0: i32, %arg1: i32) -> (i32, i32) {
    %c0_i32 = arith.constant 0 : i32
    %c0_i32_0 = arith.constant 0 : i32
    return %arg0, %c0_i32 : i32, i32
  }
}

module attributes {stable_mosaic.version = 11 : i64} {
  func.func @_norm_matmul_kernel(%arg0: i32, %arg1: i32, %arg2: memref<16x32xf32, #tpu.memory_space<vmem>>, %arg3: memref<1x32xf32, #tpu.memory_space<vmem>>, %arg4: memref<32x64xbf16, #tpu.memory_space<vmem>>, %arg5: memref<16x64xf32, #tpu.memory_space<vmem>>) attributes {dimension_semantics = [#tpu.dimension_semantics<parallel>, #tpu.dimension_semantics<parallel>], iteration_bounds = array<i64: 1, 1>, scalar_prefetch = 0 : i64, scratch_operands = 0 : i64, tpu.core_type = #tpu.core_type<tc>, window_params = [{transform_indices = @transform_0, window_bounds = array<i64: 16, 32>}, {pipeline_mode = #tpu.pipeline_mode<synchronous>, transform_indices = @transform_1, window_bounds = array<i64: 1, 32>}, {transform_indices = @transform_2, window_bounds = array<i64: 32, 64>}, {transform_indices = @transform_3, window_bounds = array<i64: 16, 64>}]} {
    %c0 = arith.constant 0 : index
    %c0_0 = arith.constant 0 : index
    %0 = vector.load %arg2[%c0, %c0_0] : memref<16x32xf32, #tpu.memory_space<vmem>>, vector<16x32xf32>
    %1 = arith.mulf %0, %0 : vector<16x32xf32>
    %cst = arith.constant dense<0.000000e+00> : vector<16xf32>
    %2 = vector.multi_reduction <add>, %1, %cst [1] : vector<16x32xf32> to vector<16xf32>
    %3 = vector.shape_cast %2 : vector<16xf32> to vector<16x1xf32>
    %cst_1 = arith.constant 3.200000e+01 : f32
    %4 = vector.broadcast %cst_1 : f32 to vector<16x1xf32>
    %5 = arith.divf %3, %4 : vector<16x1xf32>
    %cst_2 = arith.constant 9.99999974E-6 : f32
    %6 = vector.broadcast %cst_2 : f32 to vector<16x1xf32>
    %7 = arith.addf %5, %6 : vector<16x1xf32>
    %8 = math.rsqrt %7 : vector<16x1xf32>
    %9 = vector.broadcast %8 : vector<16x1xf32> to vector<16x32xf32>
    %10 = arith.mulf %0, %9 : vector<16x32xf32>
    %c0_3 = arith.constant 0 : index
    %c0_4 = arith.constant 0 : index
    %11 = vector.load %arg3[%c0_3, %c0_4] : memref<1x32xf32, #tpu.memory_space<vmem>>, vector<1x32xf32>
    %12 = vector.broadcast %11 : vector<1x32xf32> to vector<16x32xf32>
    %13 = arith.mulf %10, %12 : vector<16x32xf32>
    %14 = arith.truncf %13 : vector<16x32xf32> to vector<16x32xbf16>
    %c0_5 = arith.constant 0 : index
    %c0_6 = arith.constant 0 : index
    %15 = vector.load %arg4[%c0_5, %c0_6] : memref<32x64xbf16, #tpu.memory_space<vmem>>, vector<32x64xbf16>
    %cst_7 = arith.constant dense<0.000000e+00> : vector<16x64xf32>
    %16 = tpu.matmul %14, %15, %cst_7 {dimension_numbers = #tpu.dot_dimension_numbers<[1], [0], [0], [1], [0, 0, 1, 1], [], []>} : vector<16x32xbf16>, vector<32x64xbf16>, vector<16x64xf32> -> vector<16x64xf32>
    %c0_8 = arith.constant 0 : index
    %c0_9 = arith.constant 0 : index
    %17 = vector.load %arg5[%c0_8, %c0_9] : memref<16x64xf32, #tpu.memory_space<vmem>>, vector<16x64xf32>
    tpu.vector_store %arg5[%c0_8, %c0_9], %16 {strides = array<i32>} : memref<16x64xf32, #tpu.memory_space<vmem>>, vector<16x64xf32>,
    return
  }
  func.func @transform_0(%arg0: i32, %arg1: i32) -> (i32, i32) {
    %c0_i32 = arith.constant 0 : i32
    %c0_i32_0 = arith.constant 0 : i32
    return %arg0, %c0_i32 : i32, i32
  }
  func.func @transform_1(%arg0: i32, %arg1: i32) -> (i32, i32) {
    %c0_i32 = arith.constant 0 : i32
    %c0_i32_0 = arith.constant 0 : i32
    %c0_i32_1 = arith.constant 0 : i32
    return %c0_i32, %c0_i32_0 : i32, i32
  }
  func.func @transform_2(%arg0: i32, %arg1: i32) -> (i32, i32) {
    %c0_i32 = arith.constant 0 : i32
    %c0_i32_0 = arith.constant 0 : i32
    return %c0_i32, %arg1 : i32, i32
  }
  func.func @transform_3(%arg0: i32, %arg1: i32) -> (i32, i32) {
    %c0_i32 = arith.constant 0 : i32
    return %arg0, %arg1 : i32, i32
  }
}

</mosaic_0001>

<llo_original>
// kernel: transformer_forward.9
$region0: #{transformer_forward.9}
  #allocation0 [shape = 'u32[]', space=smem, size = 0x4, offset = 0x4, fixed_abs, tag = 'smem constant byte address 0x4 - core index']
  #allocation1 [shape = 'u32[144,128]{1,0:T(1,128)}', space=vmem, size = 0x12000, scoped, tag = 'internal scratch']
  %s0 = inlined_call_operand.vmem [shape: f32[16,32], index: 0, kind: input, shape index: {}]
  %s1 = inlined_call_operand.vmem [shape: f32[1,32], index: 1, kind: input, shape index: {}]
  %s2 = inlined_call_operand.vmem [shape: bf16[32,64], index: 2, kind: input, shape index: {}]
  %s3 = inlined_call_operand.vmem [shape: f32[16,64], index: 3, kind: output, shape index: {}]
  %s4 = sld [smem:[#allocation0]]
  $region22: #{transformer_forward.9} parent=0
    _
  %s6 = ssub.s32 1, %s4
  %s7 = scalar_select 0, %s6, %s4
  // Predicated region
  $region2: #{transformer_forward.9} parent=0 // pred_check
    _
  $region3: #{transformer_forward.9} parent=0 // pred_check_branch
    %9 = sbr.rel (0) target = $region5
  $region4: #{transformer_forward.9} parent=0 // pred_region
    _
  $region5: #{transformer_forward.9} parent=0 // pred_fallthru
    _
  // Predicated region
  $region6: #{transformer_forward.9} parent=0 // pred_check
    _
  $region7: #{transformer_forward.9} parent=0 // pred_check_branch
    %11 = sbr.rel (0) target = $region9
  $region8: #{transformer_forward.9} parent=0 // pred_region
    _
  $region9: #{transformer_forward.9} parent=0 // pred_fallthru
    _
  // Predicated region
  $region10: #{transformer_forward.9} parent=0 // pred_check
    _
  $region11: #{transformer_forward.9} parent=0 // pred_check_branch
    %13 = sbr.rel (0) target = $region13
  $region12: #{transformer_forward.9} parent=0 // pred_region
    _
  $region13: #{transformer_forward.9} parent=0 // pred_fallthru
    _
  %v15 = vld [vmem:[%s0] sm:$0xff]
  %v16 = vld [vmem:[%s0 + $0x8] sm:$0xff]
  %v17 = vmul.f32 %v15, %v15
  %v18 = vmul.f32 %v16, %v16
  %vm19 = vcmask 261120
  %v20 = vsel %vm19, %v17, 0.0
  %21 = vadd.xlane.f32.xlu0 %v20
  %v22 = vpop.xlane.xlu0 %21
  %v23 = vsel %vm19, %v18, 0.0
  %24 = vadd.xlane.f32.xlu0 %v23
  %v25 = vpop.xlane.xlu0 %24
  %v26 = vrcp.pop 32.0
  %v27 = vmul.f32 %v22, %v26
  %v28 = vmul.f32 %v25, %v26
  %v29 = vadd.f32 %v27, 1e-05
  %v30 = vadd.f32 %v28, 1e-05
  %v31 = vrsqrt.pop %v29
  %v32 = vrsqrt.pop %v30
  %v33 = vmul.f32 %v15, %v31
  %v34 = vmul.f32 %v16, %v32
  %v35 = vld [vmem:[%s1] sm:$0x1]
  %v37 = vlaneseq
  %v38 = vshrl.u32 %v37, 7
  %v39 = vsub.s32 0, %v38
  %v40 = vrot.slane %v35, %v39
  %v42 = vmul.f32 %v33, %v40
  %v43 = vmul.f32 %v34, %v40
  %v44 = vpack.c.bf16 %v43, %v42
  %v45 = vld [vmem:[%s2] sm:$0xf]
  %v46 = vld [vmem:[%s2 + $0x4] sm:$0xf]
  %v47 = vld [vmem:[%s2 + $0x8] sm:$0xf]
  %v48 = vld [vmem:[%s2 + $0xc] sm:$0xf]
  %v53 = vunpack.c.l.b16 %v45
  %v54 = vunpack.c.l.b16 %v46
  %v55 = vunpack.c.l.b16 %v47
  %v56 = vunpack.c.l.b16 %v48
  %v57 = vpack.c.b16 %v54, %v53
  %v58 = vpack.c.b16 %v56, %v55
  %v62 = vsel %vm19, %v44, 0
  %64 = vmatprep.subr.bf16.mxu0 0
  %65 = vmatpush1.bf16.msra.mxu0 %v57
  %66 = vmatprep.subr.bf16.mxu0 0
  %67 = vmatpush1.bf16.msra.mxu0 %v58
  %68 = vmatprep.subr.bf16.mxu0 0
  %69 = vmatpush1.bf16.msra.mxu0 0
  %70 = vmatprep.subr.bf16.mxu0 0
  %71 = vmatpush1.bf16.msra.mxu0 0
  %72 = vmatprep.subr.bf16.mxu0 0
  %73 = vmatpush1.bf16.msra.mxu0 0
  %74 = vmatprep.subr.bf16.mxu0 0
  %75 = vmatpush1.bf16.msra.mxu0 0
  %76 = vmatprep.subr.bf16.mxu0 0
  %77 = vmatpush1.bf16.msra.mxu0 0
  %78 = vmatprep.subr.bf16.mxu0 0
  %79 = vmatpush1.bf16.msra.mxu0 0
  %80 = vmatprep.subr.bf16.mxu0 0
  %81 = vmatpush1.bf16.msra.mxu0 0
  %82 = vmatprep.subr.bf16.mxu0 0
  %83 = vmatpush1.bf16.msra.mxu0 0
  %84 = vmatprep.subr.bf16.mxu0 0
  %85 = vmatpush1.bf16.msra.mxu0 0
  %86 = vmatprep.subr.bf16.mxu0 0
  %87 = vmatpush1.bf16.msra.mxu0 0
  %88 = vmatprep.subr.bf16.mxu0 0
  %89 = vmatpush1.bf16.msra.mxu0 0
  %90 = vmatprep.subr.bf16.mxu0 0
  %91 = vmatpush1.bf16.msra.mxu0 0
  %92 = vmatprep.subr.bf16.mxu0 0
  %93 = vmatpush1.bf16.msra.mxu0 0
  %94 = vmatprep.subr.bf16.mxu0 0
  %95 = vmatpush1.bf16.msra.mxu0 0
  %96 = vmatprep.mubr.bf16.mxu0 0
  %97 = vmatmul.mubr.bf16.gmra.mrb[0].mxu0 %v62
  %v98 = vpop.f32.mrb[0].mxu0
  %v99 = vadd.f32 0.0, %v98
  %v100 = vpop.f32.mrb[0].mxu0
  %v101 = vpop.f32.mrb[0].mxu0
  %v102 = vadd.f32 0.0, %v101
  %v103 = vpop.f32.mrb[0].mxu0
  %104 = vdwg.mxu0
  %vm105 = vcmask 523264
  %106 = vst.msk [vmem:[%s3] sm:$0xff] %vm105, %v99
  %107 = vst.msk [vmem:[%s3 + $0x8] sm:$0xff] %vm105, %v102
  // Predicated region
  $region14: #{transformer_forward.9} parent=0 // pred_check
    _
  $region15: #{transformer_forward.9} parent=0 // pred_check_branch
    %109 = sbr.rel (0) target = $region17
  $region16: #{transformer_forward.9} parent=0 // pred_region
    _
  $region17: #{transformer_forward.9} parent=0 // pred_fallthru
    _
  // Predicated region
  $region18: #{transformer_forward.9} parent=0 // pred_check
    _
  $region19: #{transformer_forward.9} parent=0 // pred_check_branch
    %111 = sbr.rel (0) target = $region21
  $region20: #{transformer_forward.9} parent=0 // pred_region
    _
  $region21: #{transformer_forward.9} parent=0 // pred_fallthru
    _

// kernel: transformer_forward.11
$region0: #{transformer_forward.11}
  #allocation0 [shape = 'u32[]', space=smem, size = 0x4, offset = 0x4, fixed_abs, tag = 'smem constant byte address 0x4 - core index']
  #allocation1 [shape = 'u32[144,128]{1,0:T(1,128)}', space=vmem, size = 0x12000, scoped, tag = 'internal scratch']
  %s0 = inlined_call_operand.vmem [shape: f32[16,32], index: 0, kind: input, shape index: {}]
  %s1 = inlined_call_operand.vmem [shape: bf16[32,32], index: 1, kind: input, shape index: {}]
  %s2 = inlined_call_operand.vmem [shape: f32[16,32], index: 2, kind: input, shape index: {}]
  %s3 = inlined_call_operand.vmem [shape: f32[16,32], index: 3, kind: output, shape index: {}]
  %s4 = sld [smem:[#allocation0]]
  $region22: #{transformer_forward.11} parent=0
    _
  %s6 = ssub.s32 1, %s4
  %s7 = scalar_select 0, %s6, %s4
  // Predicated region
  $region2: #{transformer_forward.11} parent=0 // pred_check
    _
  $region3: #{transformer_forward.11} parent=0 // pred_check_branch
    %9 = sbr.rel (0) target = $region5
  $region4: #{transformer_forward.11} parent=0 // pred_region
    _
  $region5: #{transformer_forward.11} parent=0 // pred_fallthru
    _
  // Predicated region
  $region6: #{transformer_forward.11} parent=0 // pred_check
    _
  $region7: #{transformer_forward.11} parent=0 // pred_check_branch
    %11 = sbr.rel (0) target = $region9
  $region8: #{transformer_forward.11} parent=0 // pred_region
    _
  $region9: #{transformer_forward.11} parent=0 // pred_fallthru
    _
  // Predicated region
  $region10: #{transformer_forward.11} parent=0 // pred_check
    _
  $region11: #{transformer_forward.11} parent=0 // pred_check_branch
    %13 = sbr.rel (0) target = $region13
  $region12: #{transformer_forward.11} parent=0 // pred_region
    _
  $region13: #{transformer_forward.11} parent=0 // pred_fallthru
    _
  %v15 = vld [vmem:[%s0] sm:$0xff]
  %v16 = vld [vmem:[%s0 + $0x8] sm:$0xff]
  %v17 = vpack.c.bf16 %v16, %v15
  %v18 = vld [vmem:[%s2] sm:$0xff]
  %v19 = vld [vmem:[%s2 + $0x8] sm:$0xff]
  %v20 = vld [vmem:[%s1] sm:$0xf]
  %v21 = vld [vmem:[%s1 + $0x4] sm:$0xf]
  %v22 = vld [vmem:[%s1 + $0x8] sm:$0xf]
  %v23 = vld [vmem:[%s1 + $0xc] sm:$0xf]
  %v28 = vunpack.c.l.b16 %v20
  %v29 = vunpack.c.l.b16 %v21
  %v30 = vunpack.c.l.b16 %v22
  %v31 = vunpack.c.l.b16 %v23
  %v32 = vpack.c.b16 %v29, %v28
  %v33 = vpack.c.b16 %v31, %v30
  %vm36 = vcmask 261120
  %v38 = vsel %vm36, %v17, 0
  %40 = vmatprep.subr.bf16.mxu0 0
  %41 = vmatpush1.bf16.msra.mxu0 %v32
  %42 = vmatprep.subr.bf16.mxu0 0
  %43 = vmatpush1.bf16.msra.mxu0 %v33
  %44 = vmatprep.subr.bf16.mxu0 0
  %45 = vmatpush1.bf16.msra.mxu0 0
  %46 = vmatprep.subr.bf16.mxu0 0
  %47 = vmatpush1.bf16.msra.mxu0 0
  %48 = vmatprep.subr.bf16.mxu0 0
  %49 = vmatpush1.bf16.msra.mxu0 0
  %50 = vmatprep.subr.bf16.mxu0 0
  %51 = vmatpush1.bf16.msra.mxu0 0
  %52 = vmatprep.subr.bf16.mxu0 0
  %53 = vmatpush1.bf16.msra.mxu0 0
  %54 = vmatprep.subr.bf16.mxu0 0
  %55 = vmatpush1.bf16.msra.mxu0 0
  %56 = vmatprep.subr.bf16.mxu0 0
  %57 = vmatpush1.bf16.msra.mxu0 0
  %58 = vmatprep.subr.bf16.mxu0 0
  %59 = vmatpush1.bf16.msra.mxu0 0
  %60 = vmatprep.subr.bf16.mxu0 0
  %61 = vmatpush1.bf16.msra.mxu0 0
  %62 = vmatprep.subr.bf16.mxu0 0
  %63 = vmatpush1.bf16.msra.mxu0 0
  %64 = vmatprep.subr.bf16.mxu0 0
  %65 = vmatpush1.bf16.msra.mxu0 0
  %66 = vmatprep.subr.bf16.mxu0 0
  %67 = vmatpush1.bf16.msra.mxu0 0
  %68 = vmatprep.subr.bf16.mxu0 0
  %69 = vmatpush1.bf16.msra.mxu0 0
  %70 = vmatprep.subr.bf16.mxu0 0
  %71 = vmatpush1.bf16.msra.mxu0 0
  %72 = vmatprep.mubr.bf16.mxu0 0
  %73 = vmatmul.mubr.bf16.gmra.mrb[0].mxu0 %v38
  %v74 = vpop.f32.mrb[0].mxu0
  %v75 = vadd.f32 0.0, %v74
  %v76 = vpop.f32.mrb[0].mxu0
  %v77 = vpop.f32.mrb[0].mxu0
  %v78 = vadd.f32 0.0, %v77
  %v79 = vpop.f32.mrb[0].mxu0
  %80 = vdwg.mxu0
  %v81 = vadd.f32 %v18, %v75
  %v82 = vadd.f32 %v19, %v78
  %83 = vst.msk [vmem:[%s3] sm:$0xff] %vm36, %v81
  %84 = vst.msk [vmem:[%s3 + $0x8] sm:$0xff] %vm36, %v82
  // Predicated region
  $region14: #{transformer_forward.11} parent=0 // pred_check
    _
  $region15: #{transformer_forward.11} parent=0 // pred_check_branch
    %86 = sbr.rel (0) target = $region17
  $region16: #{transformer_forward.11} parent=0 // pred_region
    _
  $region17: #{transformer_forward.11} parent=0 // pred_fallthru
    _
  // Predicated region
  $region18: #{transformer_forward.11} parent=0 // pred_check
    _
  $region19: #{transformer_forward.11} parent=0 // pred_check_branch
    %88 = sbr.rel (0) target = $region21
  $region20: #{transformer_forward.11} parent=0 // pred_region
    _
  $region21: #{transformer_forward.11} parent=0 // pred_fallthru
    _

// kernel: transformer_forward.10
$region0: #{transformer_forward.10}
  #allocation0 [shape = 'u32[]', space=smem, size = 0x4, offset = 0x4, fixed_abs, tag = 'smem constant byte address 0x4 - core index']
  #allocation1 [shape = 'u32[144,128]{1,0:T(1,128)}', space=vmem, size = 0x12000, scoped, tag = 'internal scratch']
  %s0 = inlined_call_operand.vmem [shape: f32[2,8,32], index: 0, kind: input, shape index: {}]
  %s1 = inlined_call_operand.vmem [shape: f32[2,8,16], index: 1, kind: input, shape index: {}]
  %s2 = inlined_call_operand.vmem [shape: f32[2,8,16], index: 2, kind: input, shape index: {}]
  %s3 = inlined_call_operand.vmem [shape: f32[2,8,8], index: 3, kind: input, shape index: {}]
  %s4 = inlined_call_operand.vmem [shape: f32[2,8,8], index: 4, kind: input, shape index: {}]
  %s5 = inlined_call_operand.vmem [shape: f32[2,8,8], index: 5, kind: input, shape index: {}]
  %s6 = inlined_call_operand.vmem [shape: f32[2,8,32], index: 6, kind: output, shape index: {}]
  %s7 = sld [smem:[#allocation0]]
  $region57: #{transformer_forward.10} parent=0
    _
  %s9 = ssub.s32 1, %s7
  %s10 = scalar_select 0, %s9, %s7
  loop: start=0, step=1, limit=4
  $region2: #{transformer_forward.10} parent=0 // loop_pre_header
    _
  $region3: #{transformer_forward.10} parent=0 // loop_header
    %s12 = sphi 0, %s16
    %p13 = scmp.ge.s32.totalorder %s12, 4
    %s22 = sphi 0, %s24
    %s25 = sphi 0, %s22
    %s26 = sphi 0, %s25
    %s42 = sphi 0, %s26
    %s48 = sphi 0, %s50
    %s51 = sphi 0, %s48
    %s52 = sphi 0, %s51
    %s68 = sphi 0, %s52
    %s74 = sphi 0, %s76
    %s77 = sphi 0, %s74
    %s78 = sphi 0, %s77
    %s94 = sphi 0, %s78
    %s100 = sphi 0, %s102
    %s103 = sphi 0, %s100
    %s104 = sphi 0, %s103
    %s120 = sphi 0, %s104
    %s126 = sphi 0, %s128
    %s129 = sphi 0, %s126
    %s130 = sphi 0, %s129
    %s146 = sphi 0, %s130
    %s152 = sphi 0, %s154
    %s155 = sphi 0, %s152
    %s156 = sphi 0, %s155
    %s172 = sphi 0, %s156
    %s178 = sphi 0, %s180
    %s181 = sphi 0, %s178
    %s182 = sphi 0, %s181
    %s198 = sphi 0, %s182
  $region4: #{transformer_forward.10} parent=0 // loop_header_branch
    %15 = sbr.rel (%p13) target = $region8
  $region5: #{transformer_forward.10} parent=0 // loop_body
    %s17 = ssub.s32 %s12, 1
    %s18 = ssub.s32 %s12, 2
    %s19 = sadd.s32 %s12, 1
    %s20 = ssub.s32 %s12, %s19
    %p21 = scmp.eq.s32.totalorder %s20, 0
    %s23 = sadd.s32 %s22, 1
    %s24 = scalar_select %p21, %s22, %s23
    %p27 = pneg %p21
    %p28 = scmp.eq.s32.totalorder %s12, 1
    %p29 = por %p27, %p28
    %p30 = scmp.ne.s32.totalorder %s22, %s25
    %p31 = scmp.eq.s32.totalorder %s12, 0
    %p32 = por %p30, %p31
    %p33 = scmp.ne.s32.totalorder %s22, %s25
    %p34 = scmp.eq.s32.totalorder %s17, 1
    %p35 = por %p33, %p34
    %p36 = scmp.ne.s32.totalorder %s25, %s26
    %p37 = scmp.eq.s32.totalorder %s17, 0
    %p38 = por %p36, %p37
    %p39 = scmp.ne.s32.totalorder %s25, %s26
    %p40 = scmp.eq.s32.totalorder %s18, 1
    %p41 = por %p39, %p40
    %p43 = scmp.ne.s32.totalorder %s26, %s42
    %p44 = scmp.eq.s32.totalorder %s18, 0
    %p45 = por %p43, %p44
    %s46 = ssub.s32 %s12, %s19
    %p47 = scmp.eq.s32.totalorder %s46, 0
    %s49 = sadd.s32 %s48, 1
    %s50 = scalar_select %p47, %s48, %s49
    %p53 = pneg %p47
    %p54 = scmp.eq.s32.totalorder %s12, 1
    %p55 = por %p53, %p54
    %p56 = scmp.ne.s32.totalorder %s48, %s51
    %p57 = scmp.eq.s32.totalorder %s12, 0
    %p58 = por %p56, %p57
    %p59 = scmp.ne.s32.totalorder %s48, %s51
    %p60 = scmp.eq.s32.totalorder %s17, 1
    %p61 = por %p59, %p60
    %p62 = scmp.ne.s32.totalorder %s51, %s52
    %p63 = scmp.eq.s32.totalorder %s17, 0
    %p64 = por %p62, %p63
    %p65 = scmp.ne.s32.totalorder %s51, %s52
    %p66 = scmp.eq.s32.totalorder %s18, 1
    %p67 = por %p65, %p66
    %p69 = scmp.ne.s32.totalorder %s52, %s68
    %p70 = scmp.eq.s32.totalorder %s18, 0
    %p71 = por %p69, %p70
    %s72 = ssub.s32 %s12, %s19
    %p73 = scmp.eq.s32.totalorder %s72, 0
    %s75 = sadd.s32 %s74, 1
    %s76 = scalar_select %p73, %s74, %s75
    %p79 = pneg %p73
    %p80 = scmp.eq.s32.totalorder %s12, 1
    %p81 = por %p79, %p80
    %p82 = scmp.ne.s32.totalorder %s74, %s77
    %p83 = scmp.eq.s32.totalorder %s12, 0
    %p84 = por %p82, %p83
    %p85 = scmp.ne.s32.totalorder %s74, %s77
    %p86 = scmp.eq.s32.totalorder %s17, 1
    %p87 = por %p85, %p86
    %p88 = scmp.ne.s32.totalorder %s77, %s78
    %p89 = scmp.eq.s32.totalorder %s17, 0
    %p90 = por %p88, %p89
    %p91 = scmp.ne.s32.totalorder %s77, %s78
    %p92 = scmp.eq.s32.totalorder %s18, 1
    %p93 = por %p91, %p92
    %p95 = scmp.ne.s32.totalorder %s78, %s94
    %p96 = scmp.eq.s32.totalorder %s18, 0
    %p97 = por %p95, %p96
    %s98 = ssub.s32 %s12, %s19
    %p99 = scmp.eq.s32.totalorder %s98, 0
    %s101 = sadd.s32 %s100, 1
    %s102 = scalar_select %p99, %s100, %s101
    %p105 = pneg %p99
    %p106 = scmp.eq.s32.totalorder %s12, 1
    %p107 = por %p105, %p106
    %p108 = scmp.ne.s32.totalorder %s100, %s103
    %p109 = scmp.eq.s32.totalorder %s12, 0
    %p110 = por %p108, %p109
    %p111 = scmp.ne.s32.totalorder %s100, %s103
    %p112 = scmp.eq.s32.totalorder %s17, 1
    %p113 = por %p111, %p112
    %p114 = scmp.ne.s32.totalorder %s103, %s104
    %p115 = scmp.eq.s32.totalorder %s17, 0
    %p116 = por %p114, %p115
    %p117 = scmp.ne.s32.totalorder %s103, %s104
    %p118 = scmp.eq.s32.totalorder %s18, 1
    %p119 = por %p117, %p118
    %p121 = scmp.ne.s32.totalorder %s104, %s120
    %p122 = scmp.eq.s32.totalorder %s18, 0
    %p123 = por %p121, %p122
    %s124 = ssub.s32 %s12, %s19
    %p125 = scmp.eq.s32.totalorder %s124, 0
    %s127 = sadd.s32 %s126, 1
    %s128 = scalar_select %p125, %s126, %s127
    %p131 = pneg %p125
    %p132 = scmp.eq.s32.totalorder %s12, 1
    %p133 = por %p131, %p132
    %p134 = scmp.ne.s32.totalorder %s126, %s129
    %p135 = scmp.eq.s32.totalorder %s12, 0
    %p136 = por %p134, %p135
    %p137 = scmp.ne.s32.totalorder %s126, %s129
    %p138 = scmp.eq.s32.totalorder %s17, 1
    %p139 = por %p137, %p138
    %p140 = scmp.ne.s32.totalorder %s129, %s130
    %p141 = scmp.eq.s32.totalorder %s17, 0
    %p142 = por %p140, %p141
    %p143 = scmp.ne.s32.totalorder %s129, %s130
    %p144 = scmp.eq.s32.totalorder %s18, 1
    %p145 = por %p143, %p144
    %p147 = scmp.ne.s32.totalorder %s130, %s146
    %p148 = scmp.eq.s32.totalorder %s18, 0
    %p149 = por %p147, %p148
    %s150 = ssub.s32 %s12, %s19
    %p151 = scmp.eq.s32.totalorder %s150, 0
    %s153 = sadd.s32 %s152, 1
    %s154 = scalar_select %p151, %s152, %s153
    %p157 = pneg %p151
    %p158 = scmp.eq.s32.totalorder %s12, 1
    %p159 = por %p157, %p158
    %p160 = scmp.ne.s32.totalorder %s152, %s155
    %p161 = scmp.eq.s32.totalorder %s12, 0
    %p162 = por %p160, %p161
    %p163 = scmp.ne.s32.totalorder %s152, %s155
    %p164 = scmp.eq.s32.totalorder %s17, 1
    %p165 = por %p163, %p164
    %p166 = scmp.ne.s32.totalorder %s155, %s156
    %p167 = scmp.eq.s32.totalorder %s17, 0
    %p168 = por %p166, %p167
    %p169 = scmp.ne.s32.totalorder %s155, %s156
    %p170 = scmp.eq.s32.totalorder %s18, 1
    %p171 = por %p169, %p170
    %p173 = scmp.ne.s32.totalorder %s156, %s172
    %p174 = scmp.eq.s32.totalorder %s18, 0
    %p175 = por %p173, %p174
    %s176 = ssub.s32 %s12, %s19
    %p177 = scmp.eq.s32.totalorder %s176, 0
    %s179 = sadd.s32 %s178, 1
    %s180 = scalar_select %p177, %s178, %s179
    %p183 = pneg %p177
    %p184 = scmp.eq.s32.totalorder %s12, 1
    %p185 = por %p183, %p184
    %p186 = scmp.ne.s32.totalorder %s178, %s181
    %p187 = scmp.eq.s32.totalorder %s12, 0
    %p188 = por %p186, %p187
    %p189 = scmp.ne.s32.totalorder %s178, %s181
    %p190 = scmp.eq.s32.totalorder %s17, 1
    %p191 = por %p189, %p190
    %p192 = scmp.ne.s32.totalorder %s181, %s182
    %p193 = scmp.eq.s32.totalorder %s17, 0
    %p194 = por %p192, %p193
    %p195 = scmp.ne.s32.totalorder %s181, %s182
    %p196 = scmp.eq.s32.totalorder %s18, 1
    %p197 = por %p195, %p196
    %p199 = scmp.ne.s32.totalorder %s182, %s198
    %p200 = scmp.eq.s32.totalorder %s18, 0
    %p201 = por %p199, %p200
    %p202 = scmp.le.s32.totalorder 1, %s12
    %p203 = scmp.lt.s32.totalorder %s12, 3
    %p204 = pnand %p202, %p203
    %p205 = pneg %p204
    // Predicated region
    $region9: #{transformer_forward.10} parent=5 // pred_check
      _
    $region10: #{transformer_forward.10} parent=5 // pred_check_branch
      %207 = sbr.rel (%p204) target = $region12
    $region11: #{transformer_forward.10} parent=5 // pred_region
      %s208 = ssub.s32 %s12, 1
    $region12: #{transformer_forward.10} parent=5 // pred_fallthru
      _
    %p209 = scmp.lt.s32.totalorder %s12, 2
    // Predicated region
    $region13: #{transformer_forward.10} parent=5 // pred_check
      %p210 = pneg %p209
    $region14: #{transformer_forward.10} parent=5 // pred_check_branch
      %212 = sbr.rel (%p210) target = $region16
    $region15: #{transformer_forward.10} parent=5 // pred_region
      // Predicated region
      $region17: #{transformer_forward.10} parent=15 // pred_check
        %p213 = pneg %p32
      $region18: #{transformer_forward.10} parent=15 // pred_check_branch
        %215 = sbr.rel (%p213) target = $region20
      $region19: #{transformer_forward.10} parent=15 // pred_region
        %p216 = scmp.lt.s32.totalorder %s12, 1
        %s217 = scalar_select %p216, %s12, 1
        %s218 = smul.addr %s217, 8
        %s219 = scalar_lea.vmem %s0, %s218
      $region20: #{transformer_forward.10} parent=15 // pred_fallthru
        _
      // Predicated region
      $region21: #{transformer_forward.10} parent=15 // pred_check
        %p220 = pneg %p58
      $region22: #{transformer_forward.10} parent=15 // pred_check_branch
        %222 = sbr.rel (%p220) target = $region24
      $region23: #{transformer_forward.10} parent=15 // pred_region
        %p223 = scmp.lt.s32.totalorder %s12, 1
        %s224 = scalar_select %p223, %s12, 1
        %s225 = smul.addr %s224, 8
        %s226 = scalar_lea.vmem %s1, %s225
      $region24: #{transformer_forward.10} parent=15 // pred_fallthru
        _
      // Predicated region
      $region25: #{transformer_forward.10} parent=15 // pred_check
        %p227 = pneg %p84
      $region26: #{transformer_forward.10} parent=15 // pred_check_branch
        %229 = sbr.rel (%p227) target = $region28
      $region27: #{transformer_forward.10} parent=15 // pred_region
        %p230 = scmp.lt.s32.totalorder %s12, 1
        %s231 = scalar_select %p230, %s12, 1
        %s232 = smul.addr %s231, 8
        %s233 = scalar_lea.vmem %s2, %s232
      $region28: #{transformer_forward.10} parent=15 // pred_fallthru
        _
      // Predicated region
      $region29: #{transformer_forward.10} parent=15 // pred_check
        %p234 = pneg %p110
      $region30: #{transformer_forward.10} parent=15 // pred_check_branch
        %236 = sbr.rel (%p234) target = $region32
      $region31: #{transformer_forward.10} parent=15 // pred_region
        %p237 = scmp.lt.s32.totalorder %s12, 1
        %s238 = scalar_select %p237, %s12, 1
        %s239 = smul.addr %s238, 8
        %s240 = scalar_lea.vmem %s3, %s239
      $region32: #{transformer_forward.10} parent=15 // pred_fallthru
        _
      // Predicated region
      $region33: #{transformer_forward.10} parent=15 // pred_check
        %p241 = pneg %p136
      $region34: #{transformer_forward.10} parent=15 // pred_check_branch
        %243 = sbr.rel (%p241) target = $region36
      $region35: #{transformer_forward.10} parent=15 // pred_region
        %p244 = scmp.lt.s32.totalorder %s12, 1
        %s245 = scalar_select %p244, %s12, 1
        %s246 = smul.addr %s245, 8
        %s247 = scalar_lea.vmem %s4, %s246
      $region36: #{transformer_forward.10} parent=15 // pred_fallthru
        _
      // Predicated region
      $region37: #{transformer_forward.10} parent=15 // pred_check
        %p248 = pneg %p162
      $region38: #{transformer_forward.10} parent=15 // pred_check_branch
        %250 = sbr.rel (%p248) target = $region40
      $region39: #{transformer_forward.10} parent=15 // pred_region
        %p251 = scmp.lt.s32.totalorder %s12, 1
        %s252 = scalar_select %p251, %s12, 1
        %s253 = smul.addr %s252, 8
        %s254 = scalar_lea.vmem %s5, %s253
      $region40: #{transformer_forward.10} parent=15 // pred_fallthru
        _
    $region16: #{transformer_forward.10} parent=5 // pred_fallthru
      _
    %p255 = scmp.le.s32.totalorder 1, %s12
    %p256 = scmp.lt.s32.totalorder %s12, 3
    %p257 = pnand %p255, %p256
    %p258 = pneg %p257
    // Predicated region
    $region41: #{transformer_forward.10} parent=5 // pred_check
      _
    $region42: #{transformer_forward.10} parent=5 // pred_check_branch
      %260 = sbr.rel (%p257) target = $region44
    $region43: #{transformer_forward.10} parent=5 // pred_region
      %s261 = ssub.s32 %s12, 1
      %p262 = scmp.lt.s32.totalorder %s17, 1
      %s263 = scalar_select %p262, %s17, 1
      %s264 = smul.addr %s263, 8
      %s265 = scalar_lea.vmem %s0, %s264
      %p266 = pneg %p38
      %p267 = pneg %p35
      %p268 = scmp.lt.s32.totalorder %s17, 1
      %s269 = scalar_select %p268, %s17, 1
      %s270 = smul.addr %s269, 8
      %s271 = scalar_lea.vmem %s1, %s270
      %p272 = pneg %p64
      %p273 = pneg %p61
      %p274 = scmp.lt.s32.totalorder %s17, 1
      %s275 = scalar_select %p274, %s17, 1
      %s276 = smul.addr %s275, 8
      %s277 = scalar_lea.vmem %s2, %s276
      %p278 = pneg %p90
      %p279 = pneg %p87
      %p280 = scmp.lt.s32.totalorder %s17, 1
      %s281 = scalar_select %p280, %s17, 1
      %s282 = smul.addr %s281, 8
      %s283 = scalar_lea.vmem %s3, %s282
      %p284 = pneg %p116
      %p285 = pneg %p113
      %p286 = scmp.lt.s32.totalorder %s17, 1
      %s287 = scalar_select %p286, %s17, 1
      %s288 = smul.addr %s287, 8
      %s289 = scalar_lea.vmem %s4, %s288
      %p290 = pneg %p142
      %p291 = pneg %p139
      %p292 = scmp.lt.s32.totalorder %s17, 1
      %s293 = scalar_select %p292, %s17, 1
      %s294 = smul.addr %s293, 8
      %s295 = scalar_lea.vmem %s5, %s294
      %p296 = pneg %p168
      %p297 = pneg %p165
      %p298 = pneg %p194
      %p299 = pneg %p191
      %p300 = scmp.lt.s32.totalorder %s17, 1
      %s301 = scalar_select %p300, %s17, 1
      %s302 = smul.addr %s301, 8
      %s303 = scalar_lea.vmem %s6, %s302
      %p304 = scmp.lt.s32.totalorder %s17, 1
      %s305 = scalar_select %p304, %s17, 1
      %s306 = smul.addr %s305, 8
      %s307 = scalar_lea.vmem %s0, %s306
      %p308 = scmp.lt.s32.totalorder %s17, 1
      %s309 = scalar_select %p308, %s17, 1
      %s310 = smul.addr %s309, 8
      %s311 = scalar_lea.vmem %s1, %s310
      %p312 = scmp.lt.s32.totalorder %s17, 1
      %s313 = scalar_select %p312, %s17, 1
      %s314 = smul.addr %s313, 8
      %s315 = scalar_lea.vmem %s2, %s314
      %p316 = scmp.lt.s32.totalorder %s17, 1
      %s317 = scalar_select %p316, %s17, 1
      %s318 = smul.addr %s317, 8
      %s319 = scalar_lea.vmem %s3, %s318
      %p320 = scmp.lt.s32.totalorder %s17, 1
      %s321 = scalar_select %p320, %s17, 1
      %s322 = smul.addr %s321, 8
      %s323 = scalar_lea.vmem %s4, %s322
      %p324 = scmp.lt.s32.totalorder %s17, 1
      %s325 = scalar_select %p324, %s17, 1
      %s326 = smul.addr %s325, 8
      %s327 = scalar_lea.vmem %s5, %s326
      %p328 = scmp.lt.s32.totalorder %s17, 1
      %s329 = scalar_select %p328, %s17, 1
      %s330 = smul.addr %s329, 8
      %s331 = scalar_lea.vmem %s6, %s330
      %v333 = vld [vmem:[%s307] sm:$0xff]
      %v334 = vld [vmem:[%s311] sm:$0xff]
      %v335 = vld [vmem:[%s315] sm:$0xff]
      %v336 = vld [vmem:[%s319] sm:$0xff]
      %v337 = vld [vmem:[%s323] sm:$0xff]
      %v338 = vld [vmem:[%s327] sm:$0xff]
      %v339 = vlaneseq
      %v340 = vshrl.u32 %v339, 7
      %v341 = vadd.s32 %v340, 8
      %v342 = vadd.s32 %v340, 16
      %v343 = vadd.s32 %v340, 24
      %v344 = vlaneseq
      %v345 = vand.u32 %v344, 127
      %vm346 = vcmp.lt.s32.totalorder %v345, 0
      %v347 = vsub.s32 0, %v345
      %v348 = vsel %vm346, %v347, %v345
      %v349 = vshrl.u32 %v348, 1
      %v350 = vand.u32 %v348, 1
      %v351 = vsub.s32 0, %v350
      %v352 = vsel %vm346, %v351, %v350
      %vm353 = vcmp.ne.s32.totalorder %v352, 0
      %vm354 = vcmp.lt.s32.totalorder %v352, 0
      %vm355 = vmand %vm354, %vm353
      %v356 = vadd.s32 %v352, 2
      %v357 = vsel %vm355, %v356, %v352
      %vm358 = vcmp.eq.s32.totalorder %v357, 0
      %v359 = vadd.s32 %v345, 1
      %vm360 = vcmp.eq.s32.totalorder %v340, %v359
      %vm361 = vcmp.eq.s32.totalorder %v341, %v359
      %vm362 = vcmp.eq.s32.totalorder %v342, %v359
      %vm363 = vcmp.eq.s32.totalorder %v343, %v359
      %vm364 = vmand %vm358, %vm360
      %vm365 = vmand %vm358, %vm361
      %vm366 = vmand %vm358, %vm362
      %vm367 = vmand %vm358, %vm363
      %v368 = vsel %vm364, -1.0, 0.0
      %v369 = vsel %vm365, -1.0, 0.0
      %v370 = vsel %vm366, -1.0, 0.0
      %v371 = vsel %vm367, -1.0, 0.0
      %vm372 = vcmp.eq.s32.totalorder %v357, 1
      %v373 = vsub.s32 %v345, 1
      %vm374 = vcmp.eq.s32.totalorder %v340, %v373
      %vm375 = vcmp.eq.s32.totalorder %v341, %v373
      %vm376 = vcmp.eq.s32.totalorder %v342, %v373
      %vm377 = vcmp.eq.s32.totalorder %v343, %v373
      %vm378 = vmand %vm372, %vm374
      %vm379 = vmand %vm372, %vm375
      %vm380 = vmand %vm372, %vm376
      %vm381 = vmand %vm372, %vm377
      %v382 = vsel %vm378, 1.0, 0.0
      %v383 = vsel %vm379, 1.0, 0.0
      %v384 = vsel %vm380, 1.0, 0.0
      %v385 = vsel %vm381, 1.0, 0.0
      %v386 = vadd.f32 %v368, %v382
      %v387 = vadd.f32 %v369, %v383
      %v388 = vadd.f32 %v370, %v384
      %v389 = vadd.f32 %v371, %v385
      %391 = vrot.lane.b32.xlu0 %v336, 8
      %v392 = vpop.permute.xlu0 %391
      %394 = vrot.lane.b32.xlu0 %v336, 16
      %v395 = vpop.permute.xlu0 %394
      %397 = vrot.lane.b32.xlu0 %v336, 24
      %v398 = vpop.permute.xlu0 %397
      %vm400 = vcmask 64512
      %v401 = vsel %vm400, %v336, %v392
      %vm402 = vcmask 130048
      %v403 = vsel %vm402, %v401, %v395
      %vm404 = vcmask 195584
      %v405 = vsel %vm404, %v403, %v398
      %407 = vrot.lane.b32.xlu0 %v337, 8
      %v408 = vpop.permute.xlu0 %407
      %410 = vrot.lane.b32.xlu0 %v337, 16
      %v411 = vpop.permute.xlu0 %410
      %413 = vrot.lane.b32.xlu0 %v337, 24
      %v414 = vpop.permute.xlu0 %413
      %v416 = vsel %vm400, %v337, %v408
      %v417 = vsel %vm402, %v416, %v411
      %v418 = vsel %vm404, %v417, %v414
      %vm419 = vcmask 261120
      %v421 = vsel %vm419, %v333, 0
      %423 = vmatprep.subr.mxu0 0.0
      %424 = vmatpush1.msra.mxu0 %v386
      %425 = vmatprep.subr.mxu0 0.0
      %426 = vmatpush1.msra.mxu0 %v387
      %427 = vmatprep.subr.mxu0 0.0
      %428 = vmatpush1.msra.mxu0 %v388
      %429 = vmatprep.subr.mxu0 0.0
      %430 = vmatpush1.msra.mxu0 %v389
      %431 = vmatprep.subr.mxu0 0.0
      %432 = vmatpush1.msra.mxu0 0.0
      %433 = vmatprep.subr.mxu0 0.0
      %434 = vmatpush1.msra.mxu0 0.0
      %435 = vmatprep.subr.mxu0 0.0
      %436 = vmatpush1.msra.mxu0 0.0
      %437 = vmatprep.subr.mxu0 0.0
      %438 = vmatpush1.msra.mxu0 0.0
      %439 = vmatprep.subr.mxu0 0.0
      %440 = vmatpush1.msra.mxu0 0.0
      %441 = vmatprep.subr.mxu0 0.0
      %442 = vmatpush1.msra.mxu0 0.0
      %443 = vmatprep.subr.mxu0 0.0
      %444 = vmatpush1.msra.mxu0 0.0
      %445 = vmatprep.subr.mxu0 0.0
      %446 = vmatpush1.msra.mxu0 0.0
      %447 = vmatprep.subr.mxu0 0.0
      %448 = vmatpush1.msra.mxu0 0.0
      %449 = vmatprep.subr.mxu0 0.0
      %450 = vmatpush1.msra.mxu0 0.0
      %451 = vmatprep.subr.mxu0 0.0
      %452 = vmatpush1.msra.mxu0 0.0
      %453 = vmatprep.subr.mxu0 0.0
      %454 = vmatpush1.msra.mxu0 0.0
      %455 = vmatprep.subr.mxu0 0.0
      %456 = vmatpush1.msra.mxu0 0.0
      %457 = vmatprep.subr.mxu0 0.0
      %458 = vmatpush1.msra.mxu0 0.0
      %459 = vmatprep.subr.mxu0 0.0
      %460 = vmatpush1.msra.mxu0 0.0
      %461 = vmatprep.subr.mxu0 0.0
      %462 = vmatpush1.msra.mxu0 0.0
      %463 = vmatprep.subr.mxu0 0.0
      %464 = vmatpush1.msra.mxu0 0.0
      %465 = vmatprep.subr.mxu0 0.0
      %466 = vmatpush1.msra.mxu0 0.0
      %467 = vmatprep.subr.mxu0 0.0
      %468 = vmatpush1.msra.mxu0 0.0
      %469 = vmatprep.subr.mxu0 0.0
      %470 = vmatpush1.msra.mxu0 0.0
      %471 = vmatprep.subr.mxu0 0.0
      %472 = vmatpush1.msra.mxu0 0.0
      %473 = vmatprep.subr.mxu0 0.0
      %474 = vmatpush1.msra.mxu0 0.0
      %475 = vmatprep.subr.mxu0 0.0
      %476 = vmatpush1.msra.mxu0 0.0
      %477 = vmatprep.subr.mxu0 0.0
      %478 = vmatpush1.msra.mxu0 0.0
      %479 = vmatprep.subr.mxu0 0.0
      %480 = vmatpush1.msra.mxu0 0.0
      %481 = vmatprep.subr.mxu0 0.0
      %482 = vmatpush1.msra.mxu0 0.0
      %483 = vmatprep.subr.mxu0 0.0
      %484 = vmatpush1.msra.mxu0 0.0
      %485 = vmatprep.subr.mxu0 0.0
      %486 = vmatpush1.msra.mxu0 0.0
      %487 = vmatprep.mubr.f32.mxu0 0.0
      %488 = vmatmul.mubr.f32.gmra.mrb[0].mxu0 %v421
      %v489 = vpop.f32.mrb[0].mxu0
      %v490 = vadd.f32 0.0, %v489
      %v491 = vpop.f32.mrb[0].mxu0
      %492 = vdwg.mxu0
      %v493 = vmul.f32 %v333, %v405
      %v494 = vmul.f32 %v490, %v418
      %v495 = vadd.f32 %v493, %v494
      %v496 = vmul.f32 %v495, 0.35355338
      %v498 = vsel %vm402, %v334, 0
      %500 = vmatprep.subr.mxu0 0.0
      %501 = vmatpush1.msra.mxu0 %v386
      %502 = vmatprep.subr.mxu0 0.0
      %503 = vmatpush1.msra.mxu0 %v387
      %504 = vmatprep.subr.mxu0 0.0
      %505 = vmatpush1.msra.mxu0 0.0
      %506 = vmatprep.subr.mxu0 0.0
      %507 = vmatpush1.msra.mxu0 0.0
      %508 = vmatprep.subr.mxu0 0.0
      %509 = vmatpush1.msra.mxu0 0.0
      %510 = vmatprep.subr.mxu0 0.0
      %511 = vmatpush1.msra.mxu0 0.0
      %512 = vmatprep.subr.mxu0 0.0
      %513 = vmatpush1.msra.mxu0 0.0
      %514 = vmatprep.subr.mxu0 0.0
      %515 = vmatpush1.msra.mxu0 0.0
      %516 = vmatprep.subr.mxu0 0.0
      %517 = vmatpush1.msra.mxu0 0.0
      %518 = vmatprep.subr.mxu0 0.0
      %519 = vmatpush1.msra.mxu0 0.0
      %520 = vmatprep.subr.mxu0 0.0
      %521 = vmatpush1.msra.mxu0 0.0
      %522 = vmatprep.subr.mxu0 0.0
      %523 = vmatpush1.msra.mxu0 0.0
      %524 = vmatprep.subr.mxu0 0.0
      %525 = vmatpush1.msra.mxu0 0.0
      %526 = vmatprep.subr.mxu0 0.0
      %527 = vmatpush1.msra.mxu0 0.0
      %528 = vmatprep.subr.mxu0 0.0
      %529 = vmatpush1.msra.mxu0 0.0
      %530 = vmatprep.subr.mxu0 0.0
      %531 = vmatpush1.msra.mxu0 0.0
      %532 = vmatprep.subr.mxu0 0.0
      %533 = vmatpush1.msra.mxu0 0.0
      %534 = vmatprep.subr.mxu0 0.0
      %535 = vmatpush1.msra.mxu0 0.0
      %536 = vmatprep.subr.mxu0 0.0
      %537 = vmatpush1.msra.mxu0 0.0
      %538 = vmatprep.subr.mxu0 0.0
      %539 = vmatpush1.msra.mxu0 0.0
      %540 = vmatprep.subr.mxu0 0.0
      %541 = vmatpush1.msra.mxu0 0.0
      %542 = vmatprep.subr.mxu0 0.0
      %543 = vmatpush1.msra.mxu0 0.0
      %544 = vmatprep.subr.mxu0 0.0
      %545 = vmatpush1.msra.mxu0 0.0
      %546 = vmatprep.subr.mxu0 0.0
      %547 = vmatpush1.msra.mxu0 0.0
      %548 = vmatprep.subr.mxu0 0.0
      %549 = vmatpush1.msra.mxu0 0.0
      %550 = vmatprep.subr.mxu0 0.0
      %551 = vmatpush1.msra.mxu0 0.0
      %552 = vmatprep.subr.mxu0 0.0
      %553 = vmatpush1.msra.mxu0 0.0
      %554 = vmatprep.subr.mxu0 0.0
      %555 = vmatpush1.msra.mxu0 0.0
      %556 = vmatprep.subr.mxu0 0.0
      %557 = vmatpush1.msra.mxu0 0.0
      %558 = vmatprep.subr.mxu0 0.0
      %559 = vmatpush1.msra.mxu0 0.0
      %560 = vmatprep.subr.mxu0 0.0
      %561 = vmatpush1.msra.mxu0 0.0
      %562 = vmatprep.subr.mxu0 0.0
      %563 = vmatpush1.msra.mxu0 0.0
      %564 = vmatprep.mubr.f32.mxu0 0.0
      %565 = vmatmul.mubr.f32.gmra.mrb[0].mxu0 %v498
      %v566 = vpop.f32.mrb[0].mxu0
      %v567 = vadd.f32 0.0, %v566
      %v568 = vpop.f32.mrb[0].mxu0
      %569 = vdwg.mxu0
      %v570 = vmul.f32 %v334, %v401
      %v571 = vmul.f32 %v567, %v416
      %v572 = vadd.f32 %v570, %v571
      %574 = vrot.lane.b32.xlu0 %v496, 120
      %v575 = vpop.permute.xlu0 %574
      %577 = vrot.lane.b32.xlu0 %v496, 112
      %v578 = vpop.permute.xlu0 %577
      %580 = vrot.lane.b32.xlu0 %v496, 104
      %v581 = vpop.permute.xlu0 %580
      %584 = vrot.lane.b32.xlu0 %v572, 120
      %v585 = vpop.permute.xlu0 %584
      %588 = vrot.lane.b32.xlu0 %v335, 120
      %v589 = vpop.permute.xlu0 %588
      %v591 = vpack.c.bf16 %v496, %v496
      %v592 = vpack.c.bf16 %v575, %v575
      %v593 = vpack.c.bf16 %v578, %v578
      %v594 = vpack.c.bf16 %v581, %v581
      %v595 = vpack.c.bf16 %v572, %v572
      %v596 = vpack.c.bf16 %v585, %v585
      %v598 = vsel %vm400, %v591, 0
      %v601 = vsel %vm400, %v595, 0
      %603 = vmatprep.subr.bf16.mxu0 0
      %604 = vmatpush1.bf16.xpose.msra.mxu0 %v601
      %605 = vmatprep.subr.bf16.mxu0 0
      %606 = vmatpush1.bf16.xpose.msra.mxu0 0
      %607 = vmatprep.subr.bf16.mxu0 0
      %608 = vmatpush1.bf16.xpose.msra.mxu0 0
      %609 = vmatprep.subr.bf16.mxu0 0
      %610 = vmatpush1.bf16.xpose.msra.mxu0 0
      %611 = vmatprep.subr.bf16.mxu0 0
      %612 = vmatpush1.bf16.xpose.msra.mxu0 0
      %613 = vmatprep.subr.bf16.mxu0 0
      %614 = vmatpush1.bf16.xpose.msra.mxu0 0
      %615 = vmatprep.subr.bf16.mxu0 0
      %616 = vmatpush1.bf16.xpose.msra.mxu0 0
      %617 = vmatprep.subr.bf16.mxu0 0
      %618 = vmatpush1.bf16.xpose.msra.mxu0 0
      %619 = vmatprep.subr.bf16.mxu0 0
      %620 = vmatpush1.bf16.xpose.msra.mxu0 0
      %621 = vmatprep.subr.bf16.mxu0 0
      %622 = vmatpush1.bf16.xpose.msra.mxu0 0
      %623 = vmatprep.subr.bf16.mxu0 0
      %624 = vmatpush1.bf16.xpose.msra.mxu0 0
      %625 = vmatprep.subr.bf16.mxu0 0
      %626 = vmatpush1.bf16.xpose.msra.mxu0 0
      %627 = vmatprep.subr.bf16.mxu0 0
      %628 = vmatpush1.bf16.xpose.msra.mxu0 0
      %629 = vmatprep.subr.bf16.mxu0 0
      %630 = vmatpush1.bf16.xpose.msra.mxu0 0
      %631 = vmatprep.subr.bf16.mxu0 0
      %632 = vmatpush1.bf16.xpose.msra.mxu0 0
      %633 = vmatprep.subr.bf16.mxu0 0
      %634 = vmatpush1.bf16.xpose.msra.mxu0 0
      %635 = vmatprep.mubr.bf16.mxu0 0
      %636 = vmatmul.mubr.bf16.gmra.mrb[0].mxu0 %v598
      %v637 = vpop.f32.mrb[0].mxu0
      %v638 = vadd.f32 %v338, %v637
      %v639 = vpop.f32.mrb[0].mxu0
      %v640 = vpop.f32.mrb[0].mxu0
      %v641 = vpop.f32.mrb[0].mxu0
      %642 = vdwg.mxu0
      %v644 = vsel %vm400, %v592, 0
      %646 = vmatprep.subr.bf16.mxu0 0
      %647 = vmatpush1.bf16.xpose.msra.mxu0 %v601
      %648 = vmatprep.subr.bf16.mxu0 0
      %649 = vmatpush1.bf16.xpose.msra.mxu0 0
      %650 = vmatprep.subr.bf16.mxu0 0
      %651 = vmatpush1.bf16.xpose.msra.mxu0 0
      %652 = vmatprep.subr.bf16.mxu0 0
      %653 = vmatpush1.bf16.xpose.msra.mxu0 0
      %654 = vmatprep.subr.bf16.mxu0 0
      %655 = vmatpush1.bf16.xpose.msra.mxu0 0
      %656 = vmatprep.subr.bf16.mxu0 0
      %657 = vmatpush1.bf16.xpose.msra.mxu0 0
      %658 = vmatprep.subr.bf16.mxu0 0
      %659 = vmatpush1.bf16.xpose.msra.mxu0 0
      %660 = vmatprep.subr.bf16.mxu0 0
      %661 = vmatpush1.bf16.xpose.msra.mxu0 0
      %662 = vmatprep.subr.bf16.mxu0 0
      %663 = vmatpush1.bf16.xpose.msra.mxu0 0
      %664 = vmatprep.subr.bf16.mxu0 0
      %665 = vmatpush1.bf16.xpose.msra.mxu0 0
      %666 = vmatprep.subr.bf16.mxu0 0
      %667 = vmatpush1.bf16.xpose.msra.mxu0 0
      %668 = vmatprep.subr.bf16.mxu0 0
      %669 = vmatpush1.bf16.xpose.msra.mxu0 0
      %670 = vmatprep.subr.bf16.mxu0 0
      %671 = vmatpush1.bf16.xpose.msra.mxu0 0
      %672 = vmatprep.subr.bf16.mxu0 0
      %673 = vmatpush1.bf16.xpose.msra.mxu0 0
      %674 = vmatprep.subr.bf16.mxu0 0
      %675 = vmatpush1.bf16.xpose.msra.mxu0 0
      %676 = vmatprep.subr.bf16.mxu0 0
      %677 = vmatpush1.bf16.xpose.msra.mxu0 0
      %678 = vmatprep.mubr.bf16.mxu0 0
      %679 = vmatmul.mubr.bf16.gmra.mrb[0].mxu0 %v644
      %v680 = vpop.f32.mrb[0].mxu0
      %v681 = vadd.f32 %v338, %v680
      %v682 = vpop.f32.mrb[0].mxu0
      %v683 = vpop.f32.mrb[0].mxu0
      %v684 = vpop.f32.mrb[0].mxu0
      %685 = vdwg.mxu0
      %v687 = vsel %vm400, %v593, 0
      %v690 = vsel %vm400, %v596, 0
      %692 = vmatprep.subr.bf16.mxu0 0
      %693 = vmatpush1.bf16.xpose.msra.mxu0 %v690
      %694 = vmatprep.subr.bf16.mxu0 0
      %695 = vmatpush1.bf16.xpose.msra.mxu0 0
      %696 = vmatprep.subr.bf16.mxu0 0
      %697 = vmatpush1.bf16.xpose.msra.mxu0 0
      %698 = vmatprep.subr.bf16.mxu0 0
      %699 = vmatpush1.bf16.xpose.msra.mxu0 0
      %700 = vmatprep.subr.bf16.mxu0 0
      %701 = vmatpush1.bf16.xpose.msra.mxu0 0
      %702 = vmatprep.subr.bf16.mxu0 0
      %703 = vmatpush1.bf16.xpose.msra.mxu0 0
      %704 = vmatprep.subr.bf16.mxu0 0
      %705 = vmatpush1.bf16.xpose.msra.mxu0 0
      %706 = vmatprep.subr.bf16.mxu0 0
      %707 = vmatpush1.bf16.xpose.msra.mxu0 0
      %708 = vmatprep.subr.bf16.mxu0 0
      %709 = vmatpush1.bf16.xpose.msra.mxu0 0
      %710 = vmatprep.subr.bf16.mxu0 0
      %711 = vmatpush1.bf16.xpose.msra.mxu0 0
      %712 = vmatprep.subr.bf16.mxu0 0
      %713 = vmatpush1.bf16.xpose.msra.mxu0 0
      %714 = vmatprep.subr.bf16.mxu0 0
      %715 = vmatpush1.bf16.xpose.msra.mxu0 0
      %716 = vmatprep.subr.bf16.mxu0 0
      %717 = vmatpush1.bf16.xpose.msra.mxu0 0
      %718 = vmatprep.subr.bf16.mxu0 0
      %719 = vmatpush1.bf16.xpose.msra.mxu0 0
      %720 = vmatprep.subr.bf16.mxu0 0
      %721 = vmatpush1.bf16.xpose.msra.mxu0 0
      %722 = vmatprep.subr.bf16.mxu0 0
      %723 = vmatpush1.bf16.xpose.msra.mxu0 0
      %724 = vmatprep.mubr.bf16.mxu0 0
      %725 = vmatmul.mubr.bf16.gmra.mrb[0].mxu0 %v687
      %v726 = vpop.f32.mrb[0].mxu0
      %v727 = vadd.f32 %v338, %v726
      %v728 = vpop.f32.mrb[0].mxu0
      %v729 = vpop.f32.mrb[0].mxu0
      %v730 = vpop.f32.mrb[0].mxu0
      %731 = vdwg.mxu0
      %v733 = vsel %vm400, %v594, 0
      %735 = vmatprep.subr.bf16.mxu0 0
      %736 = vmatpush1.bf16.xpose.msra.mxu0 %v690
      %737 = vmatprep.subr.bf16.mxu0 0
      %738 = vmatpush1.bf16.xpose.msra.mxu0 0
      %739 = vmatprep.subr.bf16.mxu0 0
      %740 = vmatpush1.bf16.xpose.msra.mxu0 0
      %741 = vmatprep.subr.bf16.mxu0 0
      %742 = vmatpush1.bf16.xpose.msra.mxu0 0
      %743 = vmatprep.subr.bf16.mxu0 0
      %744 = vmatpush1.bf16.xpose.msra.mxu0 0
      %745 = vmatprep.subr.bf16.mxu0 0
      %746 = vmatpush1.bf16.xpose.msra.mxu0 0
      %747 = vmatprep.subr.bf16.mxu0 0
      %748 = vmatpush1.bf16.xpose.msra.mxu0 0
      %749 = vmatprep.subr.bf16.mxu0 0
      %750 = vmatpush1.bf16.xpose.msra.mxu0 0
      %751 = vmatprep.subr.bf16.mxu0 0
      %752 = vmatpush1.bf16.xpose.msra.mxu0 0
      %753 = vmatprep.subr.bf16.mxu0 0
      %754 = vmatpush1.bf16.xpose.msra.mxu0 0
      %755 = vmatprep.subr.bf16.mxu0 0
      %756 = vmatpush1.bf16.xpose.msra.mxu0 0
      %757 = vmatprep.subr.bf16.mxu0 0
      %758 = vmatpush1.bf16.xpose.msra.mxu0 0
      %759 = vmatprep.subr.bf16.mxu0 0
      %760 = vmatpush1.bf16.xpose.msra.mxu0 0
      %761 = vmatprep.subr.bf16.mxu0 0
      %762 = vmatpush1.bf16.xpose.msra.mxu0 0
      %763 = vmatprep.subr.bf16.mxu0 0
      %764 = vmatpush1.bf16.xpose.msra.mxu0 0
      %765 = vmatprep.subr.bf16.mxu0 0
      %766 = vmatpush1.bf16.xpose.msra.mxu0 0
      %767 = vmatprep.mubr.bf16.mxu0 0
      %768 = vmatmul.mubr.bf16.gmra.mrb[0].mxu0 %v733
      %v769 = vpop.f32.mrb[0].mxu0
      %v770 = vadd.f32 %v338, %v769
      %v771 = vpop.f32.mrb[0].mxu0
      %v772 = vpop.f32.mrb[0].mxu0
      %v773 = vpop.f32.mrb[0].mxu0
      %774 = vdwg.mxu0
      %v775 = vsel %vm400, %v638, -inf
      %776 = vmax.xlane.f32.xlu0 %v775
      %v777 = vpop.xlane.xlu0 %776
      %v778 = vsel %vm400, %v681, -inf
      %779 = vmax.xlane.f32.xlu0 %v778
      %v780 = vpop.xlane.xlu0 %779
      %v781 = vsel %vm400, %v727, -inf
      %782 = vmax.xlane.f32.xlu0 %v781
      %v783 = vpop.xlane.xlu0 %782
      %v784 = vsel %vm400, %v770, -inf
      %785 = vmax.xlane.f32.xlu0 %v784
      %v786 = vpop.xlane.xlu0 %785
      %v787 = vsub.f32 %v638, %v777
      %v788 = vsub.f32 %v681, %v780
      %v789 = vsub.f32 %v727, %v783
      %v790 = vsub.f32 %v770, %v786
      %v791 = vmul.f32 %v787, 1.442695
      %v792 = vpow.pop %v791
      %v793 = vmul.f32 %v788, 1.442695
      %v794 = vpow.pop %v793
      %v795 = vmul.f32 %v789, 1.442695
      %v796 = vpow.pop %v795
      %v797 = vmul.f32 %v790, 1.442695
      %v798 = vpow.pop %v797
      %v799 = vsel %vm400, %v792, 0.0
      %800 = vadd.xlane.f32.xlu0 %v799
      %v801 = vpop.xlane.xlu0 %800
      %v802 = vsel %vm400, %v794, 0.0
      %803 = vadd.xlane.f32.xlu0 %v802
      %v804 = vpop.xlane.xlu0 %803
      %v805 = vsel %vm400, %v796, 0.0
      %806 = vadd.xlane.f32.xlu0 %v805
      %v807 = vpop.xlane.xlu0 %806
      %v808 = vsel %vm400, %v798, 0.0
      %809 = vadd.xlane.f32.xlu0 %v808
      %v810 = vpop.xlane.xlu0 %809
      %v811 = vpack.c.bf16 %v792, %v792
      %v812 = vpack.c.bf16 %v794, %v794
      %v813 = vpack.c.bf16 %v796, %v796
      %v814 = vpack.c.bf16 %v798, %v798
      %v815 = vpack.c.bf16 %v335, %v335
      %v816 = vpack.c.bf16 %v589, %v589
      %v818 = vsel %vm400, %v811, 0
      %vm820 = vcmask 1043456
      %v822 = vsel %vm820, %v815, 0
      %824 = vmatprep.subr.bf16.mxu0 0
      %825 = vmatpush1.bf16.msra.mxu0 %v822
      %826 = vmatprep.subr.bf16.mxu0 0
      %827 = vmatpush1.bf16.msra.mxu0 0
      %828 = vmatprep.subr.bf16.mxu0 0
      %829 = vmatpush1.bf16.msra.mxu0 0
      %830 = vmatprep.subr.bf16.mxu0 0
      %831 = vmatpush1.bf16.msra.mxu0 0
      %832 = vmatprep.subr.bf16.mxu0 0
      %833 = vmatpush1.bf16.msra.mxu0 0
      %834 = vmatprep.subr.bf16.mxu0 0
      %835 = vmatpush1.bf16.msra.mxu0 0
      %836 = vmatprep.subr.bf16.mxu0 0
      %837 = vmatpush1.bf16.msra.mxu0 0
      %838 = vmatprep.subr.bf16.mxu0 0
      %839 = vmatpush1.bf16.msra.mxu0 0
      %840 = vmatprep.subr.bf16.mxu0 0
      %841 = vmatpush1.bf16.msra.mxu0 0
      %842 = vmatprep.subr.bf16.mxu0 0
      %843 = vmatpush1.bf16.msra.mxu0 0
      %844 = vmatprep.subr.bf16.mxu0 0
      %845 = vmatpush1.bf16.msra.mxu0 0
      %846 = vmatprep.subr.bf16.mxu0 0
      %847 = vmatpush1.bf16.msra.mxu0 0
      %848 = vmatprep.subr.bf16.mxu0 0
      %849 = vmatpush1.bf16.msra.mxu0 0
      %850 = vmatprep.subr.bf16.mxu0 0
      %851 = vmatpush1.bf16.msra.mxu0 0
      %852 = vmatprep.subr.bf16.mxu0 0
      %853 = vmatpush1.bf16.msra.mxu0 0
      %854 = vmatprep.subr.bf16.mxu0 0
      %855 = vmatpush1.bf16.msra.mxu0 0
      %856 = vmatprep.mubr.bf16.mxu0 0
      %857 = vmatmul.mubr.bf16.gmra.mrb[0].mxu0 %v818
      %v858 = vpop.f32.mrb[0].mxu0
      %v859 = vadd.f32 0.0, %v858
      %v860 = vpop.f32.mrb[0].mxu0
      %v861 = vpop.f32.mrb[0].mxu0
      %v862 = vpop.f32.mrb[0].mxu0
      %863 = vdwg.mxu0
      %v865 = vsel %vm400, %v812, 0
      %867 = vmatprep.subr.bf16.mxu0 0
      %868 = vmatpush1.bf16.msra.mxu0 %v822
      %869 = vmatprep.subr.bf16.mxu0 0
      %870 = vmatpush1.bf16.msra.mxu0 0
      %871 = vmatprep.subr.bf16.mxu0 0
      %872 = vmatpush1.bf16.msra.mxu0 0
      %873 = vmatprep.subr.bf16.mxu0 0
      %874 = vmatpush1.bf16.msra.mxu0 0
      %875 = vmatprep.subr.bf16.mxu0 0
      %876 = vmatpush1.bf16.msra.mxu0 0
      %877 = vmatprep.subr.bf16.mxu0 0
      %878 = vmatpush1.bf16.msra.mxu0 0
      %879 = vmatprep.subr.bf16.mxu0 0
      %880 = vmatpush1.bf16.msra.mxu0 0
      %881 = vmatprep.subr.bf16.mxu0 0
      %882 = vmatpush1.bf16.msra.mxu0 0
      %883 = vmatprep.subr.bf16.mxu0 0
      %884 = vmatpush1.bf16.msra.mxu0 0
      %885 = vmatprep.subr.bf16.mxu0 0
      %886 = vmatpush1.bf16.msra.mxu0 0
      %887 = vmatprep.subr.bf16.mxu0 0
      %888 = vmatpush1.bf16.msra.mxu0 0
      %889 = vmatprep.subr.bf16.mxu0 0
      %890 = vmatpush1.bf16.msra.mxu0 0
      %891 = vmatprep.subr.bf16.mxu0 0
      %892 = vmatpush1.bf16.msra.mxu0 0
      %893 = vmatprep.subr.bf16.mxu0 0
      %894 = vmatpush1.bf16.msra.mxu0 0
      %895 = vmatprep.subr.bf16.mxu0 0
      %896 = vmatpush1.bf16.msra.mxu0 0
      %897 = vmatprep.subr.bf16.mxu0 0
      %898 = vmatpush1.bf16.msra.mxu0 0
      %899 = vmatprep.mubr.bf16.mxu0 0
      %900 = vmatmul.mubr.bf16.gmra.mrb[0].mxu0 %v865
      %v901 = vpop.f32.mrb[0].mxu0
      %v902 = vadd.f32 0.0, %v901
      %v903 = vpop.f32.mrb[0].mxu0
      %v904 = vpop.f32.mrb[0].mxu0
      %v905 = vpop.f32.mrb[0].mxu0
      %906 = vdwg.mxu0
      %v908 = vsel %vm400, %v813, 0
      %v911 = vsel %vm820, %v816, 0
      %913 = vmatprep.subr.bf16.mxu0 0
      %914 = vmatpush1.bf16.msra.mxu0 %v911
      %915 = vmatprep.subr.bf16.mxu0 0
      %916 = vmatpush1.bf16.msra.mxu0 0
      %917 = vmatprep.subr.bf16.mxu0 0
      %918 = vmatpush1.bf16.msra.mxu0 0
      %919 = vmatprep.subr.bf16.mxu0 0
      %920 = vmatpush1.bf16.msra.mxu0 0
      %921 = vmatprep.subr.bf16.mxu0 0
      %922 = vmatpush1.bf16.msra.mxu0 0
      %923 = vmatprep.subr.bf16.mxu0 0
      %924 = vmatpush1.bf16.msra.mxu0 0
      %925 = vmatprep.subr.bf16.mxu0 0
      %926 = vmatpush1.bf16.msra.mxu0 0
      %927 = vmatprep.subr.bf16.mxu0 0
      %928 = vmatpush1.bf16.msra.mxu0 0
      %929 = vmatprep.subr.bf16.mxu0 0
      %930 = vmatpush1.bf16.msra.mxu0 0
      %931 = vmatprep.subr.bf16.mxu0 0
      %932 = vmatpush1.bf16.msra.mxu0 0
      %933 = vmatprep.subr.bf16.mxu0 0
      %934 = vmatpush1.bf16.msra.mxu0 0
      %935 = vmatprep.subr.bf16.mxu0 0
      %936 = vmatpush1.bf16.msra.mxu0 0
      %937 = vmatprep.subr.bf16.mxu0 0
      %938 = vmatpush1.bf16.msra.mxu0 0
      %939 = vmatprep.subr.bf16.mxu0 0
      %940 = vmatpush1.bf16.msra.mxu0 0
      %941 = vmatprep.subr.bf16.mxu0 0
      %942 = vmatpush1.bf16.msra.mxu0 0
      %943 = vmatprep.subr.bf16.mxu0 0
      %944 = vmatpush1.bf16.msra.mxu0 0
      %945 = vmatprep.mubr.bf16.mxu0 0
      %946 = vmatmul.mubr.bf16.gmra.mrb[0].mxu0 %v908
      %v947 = vpop.f32.mrb[0].mxu0
      %v948 = vadd.f32 0.0, %v947
      %v949 = vpop.f32.mrb[0].mxu0
      %v950 = vpop.f32.mrb[0].mxu0
      %v951 = vpop.f32.mrb[0].mxu0
      %952 = vdwg.mxu0
      %v954 = vsel %vm400, %v814, 0
      %956 = vmatprep.subr.bf16.mxu0 0
      %957 = vmatpush1.bf16.msra.mxu0 %v911
      %958 = vmatprep.subr.bf16.mxu0 0
      %959 = vmatpush1.bf16.msra.mxu0 0
      %960 = vmatprep.subr.bf16.mxu0 0
      %961 = vmatpush1.bf16.msra.mxu0 0
      %962 = vmatprep.subr.bf16.mxu0 0
      %963 = vmatpush1.bf16.msra.mxu0 0
      %964 = vmatprep.subr.bf16.mxu0 0
      %965 = vmatpush1.bf16.msra.mxu0 0
      %966 = vmatprep.subr.bf16.mxu0 0
      %967 = vmatpush1.bf16.msra.mxu0 0
      %968 = vmatprep.subr.bf16.mxu0 0
      %969 = vmatpush1.bf16.msra.mxu0 0
      %970 = vmatprep.subr.bf16.mxu0 0
      %971 = vmatpush1.bf16.msra.mxu0 0
      %972 = vmatprep.subr.bf16.mxu0 0
      %973 = vmatpush1.bf16.msra.mxu0 0
      %974 = vmatprep.subr.bf16.mxu0 0
      %975 = vmatpush1.bf16.msra.mxu0 0
      %976 = vmatprep.subr.bf16.mxu0 0
      %977 = vmatpush1.bf16.msra.mxu0 0
      %978 = vmatprep.subr.bf16.mxu0 0
      %979 = vmatpush1.bf16.msra.mxu0 0
      %980 = vmatprep.subr.bf16.mxu0 0
      %981 = vmatpush1.bf16.msra.mxu0 0
      %982 = vmatprep.subr.bf16.mxu0 0
      %983 = vmatpush1.bf16.msra.mxu0 0
      %984 = vmatprep.subr.bf16.mxu0 0
      %985 = vmatpush1.bf16.msra.mxu0 0
      %986 = vmatprep.subr.bf16.mxu0 0
      %987 = vmatpush1.bf16.msra.mxu0 0
      %988 = vmatprep.mubr.bf16.mxu0 0
      %989 = vmatmul.mubr.bf16.gmra.mrb[0].mxu0 %v954
      %v990 = vpop.f32.mrb[0].mxu0
      %v991 = vadd.f32 0.0, %v990
      %v992 = vpop.f32.mrb[0].mxu0
      %v993 = vpop.f32.mrb[0].mxu0
      %v994 = vpop.f32.mrb[0].mxu0
      %995 = vdwg.mxu0
      %v996 = vrcp.pop %v801
      %v997 = vrcp.pop %v804
      %v998 = vrcp.pop %v807
      %v999 = vrcp.pop %v810
      %v1000 = vmul.f32 %v859, %v996
      %v1001 = vmul.f32 %v902, %v997
      %v1002 = vmul.f32 %v948, %v998
      %v1003 = vmul.f32 %v991, %v999
      %1005 = vrot.lane.b32.xlu0 %v1001, 8
      %v1006 = vpop.permute.xlu0 %1005
      %1009 = vrot.lane.b32.xlu0 %v1002, 16
      %v1010 = vpop.permute.xlu0 %1009
      %1013 = vrot.lane.b32.xlu0 %v1003, 24
      %v1014 = vpop.permute.xlu0 %1013
      %v1016 = vsel %vm400, %v1000, %v1006
      %v1017 = vsel %vm402, %v1016, %v1010
      %v1018 = vsel %vm404, %v1017, %v1014
      %1019 = vst.msk [vmem:[%s331] sm:$0xff] %vm419, %v1018
      %p1020 = scmp.lt.s32.totalorder %s17, 1
      %s1021 = scalar_select %p1020, %s17, 1
      %s1022 = smul.addr %s1021, 8
      %s1023 = scalar_lea.vmem %s6, %s1022
      // Predicated region
      $region45: #{transformer_forward.10} parent=43 // pred_check
        %p1024 = pneg %p191
      $region46: #{transformer_forward.10} parent=43 // pred_check_branch
        %1026 = sbr.rel (%p1024) target = $region48
      $region47: #{transformer_forward.10} parent=43 // pred_region
        _
      $region48: #{transformer_forward.10} parent=43 // pred_fallthru
        _
    $region44: #{transformer_forward.10} parent=5 // pred_fallthru
      _
    %p1027 = scmp.le.s32.totalorder 2, %s12
    // Predicated region
    $region49: #{transformer_forward.10} parent=5 // pred_check
      %p1028 = pneg %p1027
    $region50: #{transformer_forward.10} parent=5 // pred_check_branch
      %1030 = sbr.rel (%p1028) target = $region52
    $region51: #{transformer_forward.10} parent=5 // pred_region
      %s1031 = ssub.s32 %s12, 2
      // Predicated region
      $region53: #{transformer_forward.10} parent=51 // pred_check
        %p1032 = pneg %p197
      $region54: #{transformer_forward.10} parent=51 // pred_check_branch
        %1034 = sbr.rel (%p1032) target = $region56
      $region55: #{transformer_forward.10} parent=51 // pred_region
        %p1035 = scmp.lt.s32.totalorder %s18, 1
        %s1036 = scalar_select %p1035, %s18, 1
        %s1037 = smul.addr %s1036, 8
        %s1038 = scalar_lea.vmem %s6, %s1037
      $region56: #{transformer_forward.10} parent=51 // pred_fallthru
        _
    $region52: #{transformer_forward.10} parent=5 // pred_fallthru
      _
  $region6: #{transformer_forward.10} parent=0 // loop_footer
    %s16 = sadd.s32 1, %s12
  $region7: #{transformer_forward.10} parent=0 // loop_footer_branch
    %11 = sbr.rel target = $region3
  $region8: #{transformer_forward.10} parent=0 // loop_exit
    _

// kernel: transformer_forward.12
$region0: #{transformer_forward.12}
  #allocation0 [shape = 'u32[]', space=smem, size = 0x4, offset = 0x4, fixed_abs, tag = 'smem constant byte address 0x4 - core index']
  #allocation1 [shape = 'u32[144,128]{1,0:T(1,128)}', space=vmem, size = 0x12000, scoped, tag = 'internal scratch']
  #allocation2 [shape = 'bf16[16,32]{1,0:T(16,128)(2,1)}', space=vmem, size = 0x1000, scoped, tag = 'scratch operand']
  %s0 = inlined_call_operand.vmem [shape: f32[16,32], index: 0, kind: input, shape index: {}]
  %s1 = inlined_call_operand.vmem [shape: f32[1,32], index: 1, kind: input, shape index: {}]
  %s2 = inlined_call_operand.vmem [shape: bf16[32,64], index: 2, kind: input, shape index: {}]
  %s3 = inlined_call_operand.vmem [shape: bf16[32,64], index: 3, kind: input, shape index: {}]
  %s4 = inlined_call_operand.vmem [shape: bf16[64,32], index: 4, kind: input, shape index: {}]
  %s5 = inlined_call_operand.vmem [shape: f32[16,32], index: 5, kind: output, shape index: {}]
  %s6 = sld [smem:[#allocation0]]
  $region34: #{transformer_forward.12} parent=0
    _
  %s8 = ssub.s32 1, %s6
  %s9 = scalar_select 0, %s8, %s6
  // Predicated region
  $region2: #{transformer_forward.12} parent=0 // pred_check
    _
  $region3: #{transformer_forward.12} parent=0 // pred_check_branch
    %11 = sbr.rel (0) target = $region5
  $region4: #{transformer_forward.12} parent=0 // pred_region
    _
  $region5: #{transformer_forward.12} parent=0 // pred_fallthru
    _
  // Predicated region
  $region6: #{transformer_forward.12} parent=0 // pred_check
    _
  $region7: #{transformer_forward.12} parent=0 // pred_check_branch
    %13 = sbr.rel (0) target = $region9
  $region8: #{transformer_forward.12} parent=0 // pred_region
    _
  $region9: #{transformer_forward.12} parent=0 // pred_fallthru
    _
  // Predicated region
  $region10: #{transformer_forward.12} parent=0 // pred_check
    _
  $region11: #{transformer_forward.12} parent=0 // pred_check_branch
    %15 = sbr.rel (0) target = $region13
  $region12: #{transformer_forward.12} parent=0 // pred_region
    _
  $region13: #{transformer_forward.12} parent=0 // pred_fallthru
    _
  // Predicated region
  $region14: #{transformer_forward.12} parent=0 // pred_check
    _
  $region15: #{transformer_forward.12} parent=0 // pred_check_branch
    %17 = sbr.rel (0) target = $region17
  $region16: #{transformer_forward.12} parent=0 // pred_region
    _
  $region17: #{transformer_forward.12} parent=0 // pred_fallthru
    _
  // Predicated region
  $region18: #{transformer_forward.12} parent=0 // pred_check
    _
  $region19: #{transformer_forward.12} parent=0 // pred_check_branch
    %19 = sbr.rel (0) target = $region21
  $region20: #{transformer_forward.12} parent=0 // pred_region
    _
  $region21: #{transformer_forward.12} parent=0 // pred_fallthru
    _
  %p21 = scmp.eq.s32.totalorder 0, 0
  // Predicated region
  $region22: #{transformer_forward.12} parent=0 // pred_check
    %p22 = pneg %p21
  $region23: #{transformer_forward.12} parent=0 // pred_check_branch
    %24 = sbr.rel (%p22) target = $region25
  $region24: #{transformer_forward.12} parent=0 // pred_region
    %v25 = vld [vmem:[%s0] sm:$0xff]
    %v26 = vld [vmem:[%s0 + $0x8] sm:$0xff]
    %v27 = vmul.f32 %v25, %v25
    %v28 = vmul.f32 %v26, %v26
    %vm29 = vcmask 261120
    %v30 = vsel %vm29, %v27, 0.0
    %31 = vadd.xlane.f32.xlu0 %v30
    %v32 = vpop.xlane.xlu0 %31
    %v33 = vsel %vm29, %v28, 0.0
    %34 = vadd.xlane.f32.xlu0 %v33
    %v35 = vpop.xlane.xlu0 %34
    %v36 = vrcp.pop 32.0
    %v37 = vmul.f32 %v32, %v36
    %v38 = vmul.f32 %v35, %v36
    %v39 = vadd.f32 %v37, 1e-05
    %v40 = vadd.f32 %v38, 1e-05
    %v41 = vrsqrt.pop %v39
    %v42 = vrsqrt.pop %v40
    %v43 = vmul.f32 %v25, %v41
    %v44 = vmul.f32 %v26, %v42
    %v45 = vld [vmem:[%s1] sm:$0x1]
    %v47 = vlaneseq
    %v48 = vshrl.u32 %v47, 7
    %v49 = vsub.s32 0, %v48
    %v50 = vrot.slane %v45, %v49
    %v52 = vmul.f32 %v43, %v50
    %v53 = vmul.f32 %v44, %v50
    %v54 = vpack.c.bf16 %v53, %v52
    %55 = vst.msk [vmem:[#allocation2] sm:$0xff] %vm29, %v54
    %56 = vst.msk [vmem:[%s5] sm:$0xff] %vm29, %v25
    %57 = vst.msk [vmem:[%s5 + $0x8] sm:$0xff] %vm29, %v26
  $region25: #{transformer_forward.12} parent=0 // pred_fallthru
    _
  %v58 = vld [vmem:[#allocation2] sm:$0xff]
  %v59 = vld [vmem:[%s2] sm:$0xf]
  %v60 = vld [vmem:[%s2 + $0x4] sm:$0xf]
  %v61 = vld [vmem:[%s2 + $0x8] sm:$0xf]
  %v62 = vld [vmem:[%s2 + $0xc] sm:$0xf]
  %v67 = vunpack.c.l.b16 %v59
  %v68 = vunpack.c.l.b16 %v60
  %v69 = vunpack.c.l.b16 %v61
  %v70 = vunpack.c.l.b16 %v62
  %v71 = vpack.c.b16 %v68, %v67
  %v72 = vpack.c.b16 %v70, %v69
  %vm75 = vcmask 261120
  %v77 = vsel %vm75, %v58, 0
  %79 = vmatprep.subr.bf16.mxu0 0
  %80 = vmatpush1.bf16.msra.mxu0 %v71
  %81 = vmatprep.subr.bf16.mxu0 0
  %82 = vmatpush1.bf16.msra.mxu0 %v72
  %83 = vmatprep.subr.bf16.mxu0 0
  %84 = vmatpush1.bf16.msra.mxu0 0
  %85 = vmatprep.subr.bf16.mxu0 0
  %86 = vmatpush1.bf16.msra.mxu0 0
  %87 = vmatprep.subr.bf16.mxu0 0
  %88 = vmatpush1.bf16.msra.mxu0 0
  %89 = vmatprep.subr.bf16.mxu0 0
  %90 = vmatpush1.bf16.msra.mxu0 0
  %91 = vmatprep.subr.bf16.mxu0 0
  %92 = vmatpush1.bf16.msra.mxu0 0
  %93 = vmatprep.subr.bf16.mxu0 0
  %94 = vmatpush1.bf16.msra.mxu0 0
  %95 = vmatprep.subr.bf16.mxu0 0
  %96 = vmatpush1.bf16.msra.mxu0 0
  %97 = vmatprep.subr.bf16.mxu0 0
  %98 = vmatpush1.bf16.msra.mxu0 0
  %99 = vmatprep.subr.bf16.mxu0 0
  %100 = vmatpush1.bf16.msra.mxu0 0
  %101 = vmatprep.subr.bf16.mxu0 0
  %102 = vmatpush1.bf16.msra.mxu0 0
  %103 = vmatprep.subr.bf16.mxu0 0
  %104 = vmatpush1.bf16.msra.mxu0 0
  %105 = vmatprep.subr.bf16.mxu0 0
  %106 = vmatpush1.bf16.msra.mxu0 0
  %107 = vmatprep.subr.bf16.mxu0 0
  %108 = vmatpush1.bf16.msra.mxu0 0
  %109 = vmatprep.subr.bf16.mxu0 0
  %110 = vmatpush1.bf16.msra.mxu0 0
  %111 = vmatprep.mubr.bf16.mxu0 0
  %112 = vmatmul.mubr.bf16.gmra.mrb[0].mxu0 %v77
  %v113 = vpop.f32.mrb[0].mxu0
  %v114 = vadd.f32 0.0, %v113
  %v115 = vpop.f32.mrb[0].mxu0
  %v116 = vpop.f32.mrb[0].mxu0
  %v117 = vadd.f32 0.0, %v116
  %v118 = vpop.f32.mrb[0].mxu0
  %119 = vdwg.mxu0
  %v120 = vld [vmem:[%s3] sm:$0xf]
  %v121 = vld [vmem:[%s3 + $0x4] sm:$0xf]
  %v122 = vld [vmem:[%s3 + $0x8] sm:$0xf]
  %v123 = vld [vmem:[%s3 + $0xc] sm:$0xf]
  %v128 = vunpack.c.l.b16 %v120
  %v129 = vunpack.c.l.b16 %v121
  %v130 = vunpack.c.l.b16 %v122
  %v131 = vunpack.c.l.b16 %v123
  %v132 = vpack.c.b16 %v129, %v128
  %v133 = vpack.c.b16 %v131, %v130
  %136 = vmatprep.subr.bf16.mxu0 0
  %137 = vmatpush1.bf16.msra.mxu0 %v132
  %138 = vmatprep.subr.bf16.mxu0 0
  %139 = vmatpush1.bf16.msra.mxu0 %v133
  %140 = vmatprep.subr.bf16.mxu0 0
  %141 = vmatpush1.bf16.msra.mxu0 0
  %142 = vmatprep.subr.bf16.mxu0 0
  %143 = vmatpush1.bf16.msra.mxu0 0
  %144 = vmatprep.subr.bf16.mxu0 0
  %145 = vmatpush1.bf16.msra.mxu0 0
  %146 = vmatprep.subr.bf16.mxu0 0
  %147 = vmatpush1.bf16.msra.mxu0 0
  %148 = vmatprep.subr.bf16.mxu0 0
  %149 = vmatpush1.bf16.msra.mxu0 0
  %150 = vmatprep.subr.bf16.mxu0 0
  %151 = vmatpush1.bf16.msra.mxu0 0
  %152 = vmatprep.subr.bf16.mxu0 0
  %153 = vmatpush1.bf16.msra.mxu0 0
  %154 = vmatprep.subr.bf16.mxu0 0
  %155 = vmatpush1.bf16.msra.mxu0 0
  %156 = vmatprep.subr.bf16.mxu0 0
  %157 = vmatpush1.bf16.msra.mxu0 0
  %158 = vmatprep.subr.bf16.mxu0 0
  %159 = vmatpush1.bf16.msra.mxu0 0
  %160 = vmatprep.subr.bf16.mxu0 0
  %161 = vmatpush1.bf16.msra.mxu0 0
  %162 = vmatprep.subr.bf16.mxu0 0
  %163 = vmatpush1.bf16.msra.mxu0 0
  %164 = vmatprep.subr.bf16.mxu0 0
  %165 = vmatpush1.bf16.msra.mxu0 0
  %166 = vmatprep.subr.bf16.mxu0 0
  %167 = vmatpush1.bf16.msra.mxu0 0
  %168 = vmatprep.mubr.bf16.mxu0 0
  %169 = vmatmul.mubr.bf16.gmra.mrb[0].mxu0 %v77
  %v170 = vpop.f32.mrb[0].mxu0
  %v171 = vadd.f32 0.0, %v170
  %v172 = vpop.f32.mrb[0].mxu0
  %v173 = vpop.f32.mrb[0].mxu0
  %v174 = vadd.f32 0.0, %v173
  %v175 = vpop.f32.mrb[0].mxu0
  %176 = vdwg.mxu0
  %v177 = vxor.u32 %v114, 2147483648
  %v178 = vxor.u32 %v117, 2147483648
  %v179 = vmul.f32 %v177, 1.442695
  %v180 = vpow.pop %v179
  %v181 = vmul.f32 %v178, 1.442695
  %v182 = vpow.pop %v181
  %v183 = vadd.f32 %v180, 1.0
  %v184 = vadd.f32 %v182, 1.0
  %v185 = vrcp.pop %v183
  %v186 = vmul.f32 1.0, %v185
  %v187 = vrcp.pop %v184
  %v188 = vmul.f32 1.0, %v187
  %v189 = vmul.f32 %v114, %v186
  %v190 = vmul.f32 %v117, %v188
  %v191 = vmul.f32 %v189, %v171
  %v192 = vmul.f32 %v190, %v174
  %v193 = vld [vmem:[%s5] sm:$0xff]
  %v194 = vld [vmem:[%s5 + $0x8] sm:$0xff]
  %v195 = vpack.c.bf16 %v192, %v191
  %v196 = vld [vmem:[%s4] sm:$0xf]
  %v197 = vld [vmem:[%s4 + $0x4] sm:$0xf]
  %v198 = vld [vmem:[%s4 + $0x8] sm:$0xf]
  %v199 = vld [vmem:[%s4 + $0xc] sm:$0xf]
  %v200 = vld [vmem:[%s4 + $0x10] sm:$0xf]
  %v201 = vld [vmem:[%s4 + $0x14] sm:$0xf]
  %v202 = vld [vmem:[%s4 + $0x18] sm:$0xf]
  %v203 = vld [vmem:[%s4 + $0x1c] sm:$0xf]
  %v212 = vunpack.c.l.b16 %v196
  %v213 = vunpack.c.l.b16 %v197
  %v214 = vunpack.c.l.b16 %v198
  %v215 = vunpack.c.l.b16 %v199
  %v216 = vunpack.c.l.b16 %v200
  %v217 = vunpack.c.l.b16 %v201
  %v218 = vunpack.c.l.b16 %v202
  %v219 = vunpack.c.l.b16 %v203
  %v220 = vpack.c.b16 %v213, %v212
  %v221 = vpack.c.b16 %v215, %v214
  %v222 = vpack.c.b16 %v217, %v216
  %v223 = vpack.c.b16 %v219, %v218
  %vm228 = vcmask 523264
  %v230 = vsel %vm228, %v195, 0
  %232 = vmatprep.subr.bf16.mxu0 0
  %233 = vmatpush1.bf16.msra.mxu0 %v220
  %234 = vmatprep.subr.bf16.mxu0 0
  %235 = vmatpush1.bf16.msra.mxu0 %v221
  %236 = vmatprep.subr.bf16.mxu0 0
  %237 = vmatpush1.bf16.msra.mxu0 %v222
  %238 = vmatprep.subr.bf16.mxu0 0
  %239 = vmatpush1.bf16.msra.mxu0 %v223
  %240 = vmatprep.subr.bf16.mxu0 0
  %241 = vmatpush1.bf16.msra.mxu0 0
  %242 = vmatprep.subr.bf16.mxu0 0
  %243 = vmatpush1.bf16.msra.mxu0 0
  %244 = vmatprep.subr.bf16.mxu0 0
  %245 = vmatpush1.bf16.msra.mxu0 0
  %246 = vmatprep.subr.bf16.mxu0 0
  %247 = vmatpush1.bf16.msra.mxu0 0
  %248 = vmatprep.subr.bf16.mxu0 0
  %249 = vmatpush1.bf16.msra.mxu0 0
  %250 = vmatprep.subr.bf16.mxu0 0
  %251 = vmatpush1.bf16.msra.mxu0 0
  %252 = vmatprep.subr.bf16.mxu0 0
  %253 = vmatpush1.bf16.msra.mxu0 0
  %254 = vmatprep.subr.bf16.mxu0 0
  %255 = vmatpush1.bf16.msra.mxu0 0
  %256 = vmatprep.subr.bf16.mxu0 0
  %257 = vmatpush1.bf16.msra.mxu0 0
  %258 = vmatprep.subr.bf16.mxu0 0
  %259 = vmatpush1.bf16.msra.mxu0 0
  %260 = vmatprep.subr.bf16.mxu0 0
  %261 = vmatpush1.bf16.msra.mxu0 0
  %262 = vmatprep.subr.bf16.mxu0 0
  %263 = vmatpush1.bf16.msra.mxu0 0
  %264 = vmatprep.mubr.bf16.mxu0 0
  %265 = vmatmul.mubr.bf16.gmra.mrb[0].mxu0 %v230
  %v266 = vpop.f32.mrb[0].mxu0
  %v267 = vadd.f32 0.0, %v266
  %v268 = vpop.f32.mrb[0].mxu0
  %v269 = vpop.f32.mrb[0].mxu0
  %v270 = vadd.f32 0.0, %v269
  %v271 = vpop.f32.mrb[0].mxu0
  %272 = vdwg.mxu0
  %v273 = vadd.f32 %v193, %v267
  %v274 = vadd.f32 %v194, %v270
  %275 = vst.msk [vmem:[%s5] sm:$0xff] %vm75, %v273
  %276 = vst.msk [vmem:[%s5 + $0x8] sm:$0xff] %vm75, %v274
  // Predicated region
  $region26: #{transformer_forward.12} parent=0 // pred_check
    _
  $region27: #{transformer_forward.12} parent=0 // pred_check_branch
    %278 = sbr.rel (0) target = $region29
  $region28: #{transformer_forward.12} parent=0 // pred_region
    _
  $region29: #{transformer_forward.12} parent=0 // pred_fallthru
    _
  // Predicated region
  $region30: #{transformer_forward.12} parent=0 // pred_check
    _
  $region31: #{transformer_forward.12} parent=0 // pred_check_branch
    %280 = sbr.rel (0) target = $region33
  $region32: #{transformer_forward.12} parent=0 // pred_region
    _
  $region33: #{transformer_forward.12} parent=0 // pred_fallthru
    _

// kernel: transformer_forward.17
$region0: #{transformer_forward.17}
  #allocation0 [shape = 'u32[]', space=smem, size = 0x4, offset = 0x4, fixed_abs, tag = 'smem constant byte address 0x4 - core index']
  #allocation1 [shape = 'u32[144,128]{1,0:T(1,128)}', space=vmem, size = 0x12000, scoped, tag = 'internal scratch']
  %s0 = inlined_call_operand.vmem [shape: f32[16,32], index: 0, kind: input, shape index: {}]
  %s1 = inlined_call_operand.vmem [shape: f32[1,32], index: 1, kind: input, shape index: {}]
  %s2 = inlined_call_operand.vmem [shape: bf16[32,64], index: 2, kind: input, shape index: {}]
  %s3 = inlined_call_operand.hbm [shape: f32[16,64], index: 3, kind: output, shape index: {}]
  %s4 = sld [smem:[#allocation0]]
  $region22: #{transformer_forward.17} parent=0
    _
  %s6 = ssub.s32 1, %s4
  %s7 = scalar_select 0, %s6, %s4
  $region1: #{transformer_forward.17} parent=0
    #allocation2 [shape = 'u8[8192]{0}', space=vmem, size = 0x2000, scoped, tag = 'output window, operand 0, single buffered']
    #allocation3 [shape = 's32[1]{0}', space=sflag, size = 0x4, scoped, tag = 'scoped memory for transformer_forward.17']
    %8 = vsyncpa [#allocation3], 0
    // Predicated region
    $region2: #{transformer_forward.17} parent=1 // pred_check
      _
    $region3: #{transformer_forward.17} parent=1 // pred_check_branch
      %10 = sbr.rel (0) target = $region5
    $region4: #{transformer_forward.17} parent=1 // pred_region
      _
    $region5: #{transformer_forward.17} parent=1 // pred_fallthru
      _
    // Predicated region
    $region6: #{transformer_forward.17} parent=1 // pred_check
      _
    $region7: #{transformer_forward.17} parent=1 // pred_check_branch
      %12 = sbr.rel (0) target = $region9
    $region8: #{transformer_forward.17} parent=1 // pred_region
      _
    $region9: #{transformer_forward.17} parent=1 // pred_fallthru
      _
    // Predicated region
    $region10: #{transformer_forward.17} parent=1 // pred_check
      _
    $region11: #{transformer_forward.17} parent=1 // pred_check_branch
      %14 = sbr.rel (0) target = $region13
    $region12: #{transformer_forward.17} parent=1 // pred_region
      _
    $region13: #{transformer_forward.17} parent=1 // pred_fallthru
      _
    %v16 = vld [vmem:[%s0] sm:$0xff]
    %v17 = vld [vmem:[%s0 + $0x8] sm:$0xff]
    %v18 = vmul.f32 %v16, %v16
    %v19 = vmul.f32 %v17, %v17
    %vm20 = vcmask 261120
    %v21 = vsel %vm20, %v18, 0.0
    %22 = vadd.xlane.f32.xlu0 %v21
    %v23 = vpop.xlane.xlu0 %22
    %v24 = vsel %vm20, %v19, 0.0
    %25 = vadd.xlane.f32.xlu0 %v24
    %v26 = vpop.xlane.xlu0 %25
    %v27 = vrcp.pop 32.0
    %v28 = vmul.f32 %v23, %v27
    %v29 = vmul.f32 %v26, %v27
    %v30 = vadd.f32 %v28, 1e-05
    %v31 = vadd.f32 %v29, 1e-05
    %v32 = vrsqrt.pop %v30
    %v33 = vrsqrt.pop %v31
    %v34 = vmul.f32 %v16, %v32
    %v35 = vmul.f32 %v17, %v33
    %v36 = vld [vmem:[%s1] sm:$0x1]
    %v38 = vlaneseq
    %v39 = vshrl.u32 %v38, 7
    %v40 = vsub.s32 0, %v39
    %v41 = vrot.slane %v36, %v40
    %v43 = vmul.f32 %v34, %v41
    %v44 = vmul.f32 %v35, %v41
    %v45 = vpack.c.bf16 %v44, %v43
    %v46 = vld [vmem:[%s2] sm:$0xf]
    %v47 = vld [vmem:[%s2 + $0x4] sm:$0xf]
    %v48 = vld [vmem:[%s2 + $0x8] sm:$0xf]
    %v49 = vld [vmem:[%s2 + $0xc] sm:$0xf]
    %v54 = vunpack.c.l.b16 %v46
    %v55 = vunpack.c.l.b16 %v47
    %v56 = vunpack.c.l.b16 %v48
    %v57 = vunpack.c.l.b16 %v49
    %v58 = vpack.c.b16 %v55, %v54
    %v59 = vpack.c.b16 %v57, %v56
    %v63 = vsel %vm20, %v45, 0
    %65 = vmatprep.subr.bf16.mxu0 0
    %66 = vmatpush1.bf16.msra.mxu0 %v58
    %67 = vmatprep.subr.bf16.mxu0 0
    %68 = vmatpush1.bf16.msra.mxu0 %v59
    %69 = vmatprep.subr.bf16.mxu0 0
    %70 = vmatpush1.bf16.msra.mxu0 0
    %71 = vmatprep.subr.bf16.mxu0 0
    %72 = vmatpush1.bf16.msra.mxu0 0
    %73 = vmatprep.subr.bf16.mxu0 0
    %74 = vmatpush1.bf16.msra.mxu0 0
    %75 = vmatprep.subr.bf16.mxu0 0
    %76 = vmatpush1.bf16.msra.mxu0 0
    %77 = vmatprep.subr.bf16.mxu0 0
    %78 = vmatpush1.bf16.msra.mxu0 0
    %79 = vmatprep.subr.bf16.mxu0 0
    %80 = vmatpush1.bf16.msra.mxu0 0
    %81 = vmatprep.subr.bf16.mxu0 0
    %82 = vmatpush1.bf16.msra.mxu0 0
    %83 = vmatprep.subr.bf16.mxu0 0
    %84 = vmatpush1.bf16.msra.mxu0 0
    %85 = vmatprep.subr.bf16.mxu0 0
    %86 = vmatpush1.bf16.msra.mxu0 0
    %87 = vmatprep.subr.bf16.mxu0 0
    %88 = vmatpush1.bf16.msra.mxu0 0
    %89 = vmatprep.subr.bf16.mxu0 0
    %90 = vmatpush1.bf16.msra.mxu0 0
    %91 = vmatprep.subr.bf16.mxu0 0
    %92 = vmatpush1.bf16.msra.mxu0 0
    %93 = vmatprep.subr.bf16.mxu0 0
    %94 = vmatpush1.bf16.msra.mxu0 0
    %95 = vmatprep.subr.bf16.mxu0 0
    %96 = vmatpush1.bf16.msra.mxu0 0
    %97 = vmatprep.mubr.bf16.mxu0 0
    %98 = vmatmul.mubr.bf16.gmra.mrb[0].mxu0 %v63
    %v99 = vpop.f32.mrb[0].mxu0
    %v100 = vadd.f32 0.0, %v99
    %v101 = vpop.f32.mrb[0].mxu0
    %v102 = vpop.f32.mrb[0].mxu0
    %v103 = vadd.f32 0.0, %v102
    %v104 = vpop.f32.mrb[0].mxu0
    %105 = vdwg.mxu0
    %vm106 = vcmask 523264
    %107 = vst.msk [vmem:[#allocation2] sm:$0xff] %vm106, %v100
    %108 = vst.msk [vmem:[#allocation2 + $0x8] sm:$0xff] %vm106, %v103
    // Predicated region
    $region14: #{transformer_forward.17} parent=1 // pred_check
      _
    $region15: #{transformer_forward.17} parent=1 // pred_check_branch
      %110 = sbr.rel (0) target = $region17
    $region16: #{transformer_forward.17} parent=1 // pred_region
      %s112 = ssub.s32 256, 256
      %113 = vsyncadd [#allocation3], %s112
      %s114 = sshll.u32 [#allocation2], 4
      %s115 = int_to_ptr.vmem [resolvable:$true] %s114
      %120 = dma.vmem_to_hbm [thread:$0]  %s115, 256, %s3, [#allocation3], 128, 128, 8
    $region17: #{transformer_forward.17} parent=1 // pred_fallthru
      _
    // Predicated region
    $region18: #{transformer_forward.17} parent=1 // pred_check
      _
    $region19: #{transformer_forward.17} parent=1 // pred_check_branch
      %122 = sbr.rel (0) target = $region21
    $region20: #{transformer_forward.17} parent=1 // pred_region
      %123 = dma.done [#allocation3], 256
    $region21: #{transformer_forward.17} parent=1 // pred_fallthru
      _
    %124 = vsyncpa [#allocation3], 1

</llo_original>
